<compile_context>
chip_gen: v7x
topology: tpu7x:2x2x1
jax: 0.10.0
libtpu: 0.0.40
codegen_flags: <defaults>
</compile_context>

<pallas_src>
import functools

import jax
import jax.numpy as jnp
from jax.experimental import pallas as pl
from jax.experimental.pallas import tpu as pltpu


def _round_up(x, m):
    return (x + m - 1) // m * m


def dense_node_decoder_kernel(z_ref, we_ref, be_ref, c0_ref, cn_ref,
                              w3_ref, b3_ref, w4_ref, b4_ref,
                              w5_ref, b5_ref, w6_ref, b6_ref,
                              out_ref, *, n_real):
    """One grid step: TILE_N output nodes from a (TILE_N+4)-row halo'd z tile."""
    t = out_ref.shape[0]                                    # TILE_N (static)

    x = jnp.maximum(z_ref[0], 0.0)                          # ReLU   (T+4, D) bf16

    # Fused k=5 conv (Conv1d(D,512,3,'same') o Conv1d(512,256,3,'same')):
    # 5 static sublane-offset views, each a (T, D) @ (D, 256) MXU matmul.
    h = (jnp.dot(x[0:t], we_ref[0], preferred_element_type=jnp.float32)
         + jnp.dot(x[1:t + 1], we_ref[1], preferred_element_type=jnp.float32)
         + jnp.dot(x[2:t + 2], we_ref[2], preferred_element_type=jnp.float32)
         + jnp.dot(x[3:t + 3], we_ref[3], preferred_element_type=jnp.float32)
         + jnp.dot(x[4:t + 4], we_ref[4], preferred_element_type=jnp.float32)
         + be_ref[...])                                     # (T, 256) f32

    # PyTorch 'same' boundary fix: the second conv must see ZERO first-conv rows
    # outside [0, N).  Subtract the phantom-row contribution at global nodes 0
    # and N-1 (precomputed in the wrapper).  Pure VPU work, no extra matmuls.
    gidx = (jax.lax.broadcasted_iota(jnp.int32, (t, 1), 0)
            + pl.program_id(0) * t)                         # global node index
    h = h - jnp.where(gidx == 0, 1.0, 0.0) * c0_ref[...]
    h = h - jnp.where(gidx == n_real - 1, 1.0, 0.0) * cn_ref[...]

    h = jnp.maximum(h, 0.0)                                 # ReLU (Dropout = identity)
    h = jnp.maximum(
        jnp.dot(h.astype(jnp.bfloat16), w3_ref[...],
                preferred_element_type=jnp.float32) + b3_ref[...], 0.0)  # (T, 128)
    h = jnp.maximum(
        jnp.dot(h.astype(jnp.bfloat16), w4_ref[...],
                preferred_element_type=jnp.float32) + b4_ref[...], 0.0)  # (T, 128) [64 real]
    h = (jnp.dot(h.astype(jnp.bfloat16), w5_ref[...],
                 preferred_element_type=jnp.float32) + b5_ref[...])      # (T, 128) [16 real]
    h = jnp.maximum(h, 0.0)                                 # compressing ReLU
    logit = (jnp.dot(h.astype(jnp.bfloat16), w6_ref[...],
                     preferred_element_type=jnp.float32) + b6_ref[...])  # (T, 1)
    out_ref[...] = jax.nn.sigmoid(logit)                    # NodeNN default sigmoid=True


def _resident_spec(arr):
    """Full-array block with a constant block index -> DMA'd once, stays in VMEM."""
    zeros = (0,) * arr.ndim
    return pl.BlockSpec(arr.shape, lambda i, _z=zeros: _z)


def _pad2d(a, rows, cols):
    return jnp.pad(a, ((0, rows - a.shape[0]), (0, cols - a.shape[1])))


def _vmem_limit_bytes(tile_n, d):
    """Rough per-step VMEM bound (bytes), clamped to [32 MiB, 48 MiB]."""
    halo = tile_n + 4
    acts = (2 * halo * d * 2                 # double-buffered bf16 z tiles
            + halo * d * 2                   # ReLU'd x
            + 5 * tile_n * d * 2             # shifted-view relayout copies (bf16)
            + tile_n * 256 * (4 + 2)         # fused conv out (f32) + bf16 cast
            + 3 * tile_n * 128 * (4 + 2)     # padded tail stages (f32 + bf16)
            + 2 * tile_n * 4 + tile_n * 4)   # double-buffered out tile + logit
    # Resident weights have constant block indices -> DMA'd once; counted once.
    weights = ((5 * d * 256 + 256 * 128 + 2 * 128 * 128 + 128) * 2   # bf16
               + (3 * 256 + 3 * 128 + 1) * 4)                        # f32 biases/corr
    est = int(1.5 * acts) + 2 * weights + (2 << 20)
    # >= 32 MiB so small-tile compiles never starve (v5e scoped default is 16 MiB);
    # <= 48 MiB so the same tiling also fits v7x's 64 MiB physical VMEM.
    return max(min(est, 48 * 1024 * 1024), 32 * 1024 * 1024)


def dense_node_decoder(z, params, sigmoid=False, tile_n=4096):
    """Mirrors DenseNodeDecoder.forward(z, sigmoid=False) at inference time."""
    n, d = z.shape

    # Large tiles amortize the ~600-cycle per-step overhead, but cap at ceil(N/2)
    # so the "parallel" node axis has >= 2 grid steps (both v7x TCs busy).
    half = max(_round_up(-(-n // 2), 8), 8)
    tile_n = max(min(_round_up(tile_n, 8), half), 8)
    n_pad = _round_up(n, tile_n)
    num_tiles = n_pad // tile_n
    halo = tile_n + 4

    # ---- Offline (wrapper-side, f32) parameter fusion / padding ----
    w1 = params["w1"].astype(jnp.float32)        # (3, D, 512)
    b1 = params["b1"].astype(jnp.float32)        # (1, 512)
    w2 = params["w2"].astype(jnp.float32)        # (3, 512, 256)
    b2 = params["b2"].astype(jnp.float32)        # (1, 256)
    # Fused k=5 conv: W_eff[m] = sum_{k+j=m} w1[k] @ w2[j].
    w_eff = jnp.stack([
        sum(w1[k] @ w2[m - k] for k in range(3) if 0 <= m - k <= 2)
        for m in range(5)
    ])                                           # (5, D, 256) f32
    b_eff = b1 @ (w2[0] + w2[1] + w2[2]) + b2    # (1, 256) f32
    # Boundary corrections: phantom conv1 rows at node -1 / N that the fused conv
    # over zero-padded z would otherwise include (PyTorch pads conv1 OUTPUT with
    # zeros, not conv1 evaluated on padded input).
    x0 = jnp.maximum(z[0:1].astype(jnp.float32), 0.0)
    xn = jnp.maximum(z[n - 1:n].astype(jnp.float32), 0.0)
    c0 = (x0 @ w1[2] + b1) @ w2[0]               # (1, 256) f32
    cn = (xn @ w1[0] + b1) @ w2[2]               # (1, 256) f32

    # Lane-dense tail: zero-pad the narrow Linear layers to 128-wide operands
    # (free on the MXU; column 0 of the final logit is unchanged).
    w4p, b4p = _pad2d(params["w4"], 128, 128), _pad2d(params["b4"], 1, 128)
    w5p, b5p = _pad2d(params["w5"], 128, 128), _pad2d(params["b5"], 1, 128)
    w6p = _pad2d(params["w6"], 128, 1)

    bf = lambda a: a.astype(jnp.bfloat16)
    weight_args = (bf(w_eff), b_eff, c0, cn,
                   bf(params["w3"]), params["b3"],
                   bf(w4p), b4p, bf(w5p), b5p, bf(w6p), params["b6"])

    # ---- Halo'd overlapping windows via slice/reshape/concat (no row gather) ----
    # bf16 input (ReLU commutes with the cast) halves the pipelined input DMA.
    z_pad = jnp.pad(z.astype(jnp.bfloat16), ((2, (n_pad - n) + 2), (0, 0)))
    heads = z_pad[:n_pad].reshape(num_tiles, tile_n, d)          # rows [t*T, t*T+T)
    next4 = jnp.concatenate(
        [heads[1:, :4], z_pad[None, n_pad:n_pad + 4]], axis=0)   # rows [t*T+T, +4)
    z_tiles = jnp.concatenate([heads, next4], axis=1)            # (nt, T+4, D)

    in_specs = [pl.BlockSpec((1, halo, d), lambda i: (i, 0, 0))]
    in_specs += [_resident_spec(a) for a in weight_args]

    out = pl.pallas_call(
        functools.partial(dense_node_decoder_kernel, n_real=n),
        grid=(num_tiles,),
        in_specs=in_specs,
        out_specs=pl.BlockSpec((tile_n, 1), lambda i: (i, 0)),
        out_shape=jax.ShapeDtypeStruct((n_pad, 1), jnp.float32),
        compiler_params=pltpu.CompilerParams(
            dimension_semantics=("parallel",),
            vmem_limit_bytes=_vmem_limit_bytes(tile_n, d)),
    )(z_tiles, *weight_args)

    value = out[:n, 0]                                           # .view((z.size(0),))
    # DenseNodeDecoder(sigmoid=True) stacks a second sigmoid on top of NodeNN's
    # in-kernel one -- intentionally matching the PyTorch module composition.
    return jax.nn.sigmoid(value) if sigmoid else value


def init_params(key, input_dim):
    """Deterministic synthetic parameters matching the PyTorch module's shapes."""
    ks = jax.random.split(key, 12)

    def conv_w(k, cin, cout):
        # torch Conv1d weight: (cout, cin, 3); stored as (3, cin, cout) so that
        # stacked[k] == W_torch[:, :, k].T (matmul form for node shift k-1).
        w = jax.random.normal(k, (cout, cin, 3), jnp.float32) / jnp.sqrt(cin * 3.0)
        return jnp.transpose(w, (2, 1, 0))

    def lin_w(k, cin, cout):
        # torch Linear weight: (cout, cin); stored transposed as (cin, cout).
        w = jax.random.normal(k, (cout, cin), jnp.float32) / jnp.sqrt(float(cin))
        return jnp.transpose(w)

    def bias(k, c):
        return jax.random.normal(k, (1, c), jnp.float32) * 0.01

    return {
        "w1": conv_w(ks[0], input_dim, 512), "b1": bias(ks[1], 512),
        "w2": conv_w(ks[2], 512, 256),       "b2": bias(ks[3], 256),
        "w3": lin_w(ks[4], 256, 128),        "b3": bias(ks[5], 128),
        "w4": lin_w(ks[6], 128, 64),         "b4": bias(ks[7], 64),
        "w5": lin_w(ks[8], 64, 16),          "b5": bias(ks[9], 16),
        "w6": lin_w(ks[10], 16, 1),          "b6": bias(ks[11], 1),
    }


def reference_forward(z, params):
    """Pure-JAX f32 reference of DenseNodeDecoder.forward (inference, sigmoid=False)."""
    def conv(x, w, b):
        # PyTorch 'same': each conv zero-pads its OWN input at the array ends.
        zero = jnp.zeros((1, x.shape[1]), x.dtype)
        xm = jnp.concatenate([zero, x[:-1]], axis=0)
        xp = jnp.concatenate([x[1:], zero], axis=0)
        return xm @ w[0] + x @ w[1] + xp @ w[2] + b

    h = jnp.maximum(z, 0.0)
    h = conv(h, params["w1"], params["b1"])
    h = conv(h, params["w2"], params["b2"])
    h = jnp.maximum(h, 0.0)
    h = jnp.maximum(h @ params["w3"] + params["b3"], 0.0)
    h = jnp.maximum(h @ params["w4"] + params["b4"], 0.0)
    h = h @ params["w5"] + params["b5"]
    h = jnp.maximum(h, 0.0)
    logit = h @ params["w6"] + params["b6"]
    return jax.nn.sigmoid(logit).reshape((z.shape[0],))


if __name__ == "__main__":
    key = jax.random.PRNGKey(0)
    k_z, k_p = jax.random.split(key)

    # Small demo: N=160 nodes, D=8 input features, TILE_N=64 -> 3 grid steps
    # (exercises cross-tile conv halos, tail padding and both boundary fixes).
    N, D = 160, 8
    z = jax.random.normal(k_z, (N, D), jnp.float32)
    params = init_params(k_p, D)

    out = dense_node_decoder(z, params, tile_n=64)   # default: sigmoid=False (outer)
    out = jax.block_until_ready(out)

    ref = reference_forward(z, params)
    assert out.shape == (N,), out.shape
    err = float(jnp.max(jnp.abs(out - ref)))
    # bf16 matmuls (f32 accumulation) vs f32 reference -> relaxed tolerance.
    assert jnp.allclose(out, ref, rtol=3e-2, atol=3e-2), ("max abs err", err)

    print("KERNEL_OK")
</pallas_src>

<mosaic_0001>
module attributes {stable_mosaic.version = 11 : i64} {
  func.func @dense_node_decoder_kernel(%arg0: i32, %arg1: memref<1x68x8xbf16, #tpu.memory_space<vmem>>, %arg2: memref<5x8x256xbf16, #tpu.memory_space<vmem>>, %arg3: memref<1x256xf32, #tpu.memory_space<vmem>>, %arg4: memref<1x256xf32, #tpu.memory_space<vmem>>, %arg5: memref<1x256xf32, #tpu.memory_space<vmem>>, %arg6: memref<256x128xbf16, #tpu.memory_space<vmem>>, %arg7: memref<1x128xf32, #tpu.memory_space<vmem>>, %arg8: memref<128x128xbf16, #tpu.memory_space<vmem>>, %arg9: memref<1x128xf32, #tpu.memory_space<vmem>>, %arg10: memref<128x128xbf16, #tpu.memory_space<vmem>>, %arg11: memref<1x128xf32, #tpu.memory_space<vmem>>, %arg12: memref<128x1xbf16, #tpu.memory_space<vmem>>, %arg13: memref<1x1xf32, #tpu.memory_space<vmem>>, %arg14: memref<64x1xf32, #tpu.memory_space<vmem>>) attributes {dimension_semantics = [#tpu.dimension_semantics<parallel>], iteration_bounds = array<i64: 3>, scalar_prefetch = 0 : i64, scratch_operands = 0 : i64, tpu.core_type = #tpu.core_type<tc>, window_params = [{transform_indices = @transform_0, window_bounds = array<i64: 1, 68, 8>}, {pipeline_mode = #tpu.pipeline_mode<synchronous>, transform_indices = @transform_1, window_bounds = array<i64: 5, 8, 256>}, {pipeline_mode = #tpu.pipeline_mode<synchronous>, transform_indices = @transform_2, window_bounds = array<i64: 1, 256>}, {pipeline_mode = #tpu.pipeline_mode<synchronous>, transform_indices = @transform_3, window_bounds = array<i64: 1, 256>}, {pipeline_mode = #tpu.pipeline_mode<synchronous>, transform_indices = @transform_4, window_bounds = array<i64: 1, 256>}, {pipeline_mode = #tpu.pipeline_mode<synchronous>, transform_indices = @transform_5, window_bounds = array<i64: 256, 128>}, {pipeline_mode = #tpu.pipeline_mode<synchronous>, transform_indices = @transform_6, window_bounds = array<i64: 1, 128>}, {pipeline_mode = #tpu.pipeline_mode<synchronous>, transform_indices = @transform_7, window_bounds = array<i64: 128, 128>}, {pipeline_mode = #tpu.pipeline_mode<synchronous>, transform_indices = @transform_8, window_bounds = array<i64: 1, 128>}, {pipeline_mode = #tpu.pipeline_mode<synchronous>, transform_indices = @transform_9, window_bounds = array<i64: 128, 128>}, {pipeline_mode = #tpu.pipeline_mode<synchronous>, transform_indices = @transform_10, window_bounds = array<i64: 1, 128>}, {pipeline_mode = #tpu.pipeline_mode<synchronous>, transform_indices = @transform_11, window_bounds = array<i64: 128, 1>}, {pipeline_mode = #tpu.pipeline_mode<synchronous>, transform_indices = @transform_12, window_bounds = array<i64: 1, 1>}, {transform_indices = @transform_13, window_bounds = array<i64: 64, 1>}]} {
    %c0 = arith.constant 0 : index
    %c0_0 = arith.constant 0 : index
    %c0_1 = arith.constant 0 : index
    %0 = vector.load %arg1[%c0, %c0_0, %c0_1] : memref<1x68x8xbf16, #tpu.memory_space<vmem>>, vector<1x68x8xbf16>
    %1 = vector.shape_cast %0 : vector<1x68x8xbf16> to vector<68x8xbf16>
    %cst = arith.constant 0.000000e+00 : bf16
    %2 = vector.broadcast %cst : bf16 to vector<68x8xbf16>
    %3 = arith.maximumf %1, %2 : vector<68x8xbf16>
    %4 = vector.extract_strided_slice %3 {offsets = [0, 0], sizes = [64, 8], strides = [1, 1]} : vector<68x8xbf16> to vector<64x8xbf16>
    %c0_2 = arith.constant 0 : index
    %c0_3 = arith.constant 0 : index
    %c0_4 = arith.constant 0 : index
    %5 = vector.load %arg2[%c0_2, %c0_3, %c0_4] : memref<5x8x256xbf16, #tpu.memory_space<vmem>>, vector<1x8x256xbf16>
    %6 = vector.shape_cast %5 : vector<1x8x256xbf16> to vector<8x256xbf16>
    %cst_5 = arith.constant dense<0.000000e+00> : vector<64x256xf32>
    %7 = tpu.matmul %4, %6, %cst_5 {dimension_numbers = #tpu.dot_dimension_numbers<[1], [0], [0], [1], [0, 0, 1, 1], [], []>} : vector<64x8xbf16>, vector<8x256xbf16>, vector<64x256xf32> -> vector<64x256xf32>
    %8 = vector.extract_strided_slice %3 {offsets = [1, 0], sizes = [64, 8], strides = [1, 1]} : vector<68x8xbf16> to vector<64x8xbf16>
    %c1 = arith.constant 1 : index
    %c0_6 = arith.constant 0 : index
    %c0_7 = arith.constant 0 : index
    %9 = vector.load %arg2[%c1, %c0_6, %c0_7] : memref<5x8x256xbf16, #tpu.memory_space<vmem>>, vector<1x8x256xbf16>
    %10 = vector.shape_cast %9 : vector<1x8x256xbf16> to vector<8x256xbf16>
    %cst_8 = arith.constant dense<0.000000e+00> : vector<64x256xf32>
    %11 = tpu.matmul %8, %10, %cst_8 {dimension_numbers = #tpu.dot_dimension_numbers<[1], [0], [0], [1], [0, 0, 1, 1], [], []>} : vector<64x8xbf16>, vector<8x256xbf16>, vector<64x256xf32> -> vector<64x256xf32>
    %12 = arith.addf %7, %11 : vector<64x256xf32>
    %13 = vector.extract_strided_slice %3 {offsets = [2, 0], sizes = [64, 8], strides = [1, 1]} : vector<68x8xbf16> to vector<64x8xbf16>
    %c2 = arith.constant 2 : index
    %c0_9 = arith.constant 0 : index
    %c0_10 = arith.constant 0 : index
    %14 = vector.load %arg2[%c2, %c0_9, %c0_10] : memref<5x8x256xbf16, #tpu.memory_space<vmem>>, vector<1x8x256xbf16>
    %15 = vector.shape_cast %14 : vector<1x8x256xbf16> to vector<8x256xbf16>
    %cst_11 = arith.constant dense<0.000000e+00> : vector<64x256xf32>
    %16 = tpu.matmul %13, %15, %cst_11 {dimension_numbers = #tpu.dot_dimension_numbers<[1], [0], [0], [1], [0, 0, 1, 1], [], []>} : vector<64x8xbf16>, vector<8x256xbf16>, vector<64x256xf32> -> vector<64x256xf32>
    %17 = arith.addf %12, %16 : vector<64x256xf32>
    %18 = vector.extract_strided_slice %3 {offsets = [3, 0], sizes = [64, 8], strides = [1, 1]} : vector<68x8xbf16> to vector<64x8xbf16>
    %c3 = arith.constant 3 : index
    %c0_12 = arith.constant 0 : index
    %c0_13 = arith.constant 0 : index
    %19 = vector.load %arg2[%c3, %c0_12, %c0_13] : memref<5x8x256xbf16, #tpu.memory_space<vmem>>, vector<1x8x256xbf16>
    %20 = vector.shape_cast %19 : vector<1x8x256xbf16> to vector<8x256xbf16>
    %cst_14 = arith.constant dense<0.000000e+00> : vector<64x256xf32>
    %21 = tpu.matmul %18, %20, %cst_14 {dimension_numbers = #tpu.dot_dimension_numbers<[1], [0], [0], [1], [0, 0, 1, 1], [], []>} : vector<64x8xbf16>, vector<8x256xbf16>, vector<64x256xf32> -> vector<64x256xf32>
    %22 = arith.addf %17, %21 : vector<64x256xf32>
    %23 = vector.extract_strided_slice %3 {offsets = [4, 0], sizes = [64, 8], strides = [1, 1]} : vector<68x8xbf16> to vector<64x8xbf16>
    %c4 = arith.constant 4 : index
    %c0_15 = arith.constant 0 : index
    %c0_16 = arith.constant 0 : index
    %24 = vector.load %arg2[%c4, %c0_15, %c0_16] : memref<5x8x256xbf16, #tpu.memory_space<vmem>>, vector<1x8x256xbf16>
    %25 = vector.shape_cast %24 : vector<1x8x256xbf16> to vector<8x256xbf16>
    %cst_17 = arith.constant dense<0.000000e+00> : vector<64x256xf32>
    %26 = tpu.matmul %23, %25, %cst_17 {dimension_numbers = #tpu.dot_dimension_numbers<[1], [0], [0], [1], [0, 0, 1, 1], [], []>} : vector<64x8xbf16>, vector<8x256xbf16>, vector<64x256xf32> -> vector<64x256xf32>
    %27 = arith.addf %22, %26 : vector<64x256xf32>
    %c0_18 = arith.constant 0 : index
    %c0_19 = arith.constant 0 : index
    %28 = vector.load %arg3[%c0_18, %c0_19] : memref<1x256xf32, #tpu.memory_space<vmem>>, vector<1x256xf32>
    %29 = vector.broadcast %28 : vector<1x256xf32> to vector<64x256xf32>
    %30 = arith.addf %27, %29 : vector<64x256xf32>
    %31 = tpu.iota {dimensions = array<i32: 0>} : vector<64x1xi32>
    %c64_i32 = arith.constant 64 : i32
    %32 = arith.muli %arg0, %c64_i32 : i32
    %33 = vector.broadcast %32 : i32 to vector<64x1xi32>
    %34 = arith.addi %31, %33 : vector<64x1xi32>
    %c0_i32 = arith.constant 0 : i32
    %35 = vector.broadcast %c0_i32 : i32 to vector<64x1xi32>
    %36 = arith.cmpi eq, %34, %35 : vector<64x1xi32>
    %cst_20 = arith.constant 1.000000e+00 : f32
    %cst_21 = arith.constant 0.000000e+00 : f32
    %37 = vector.broadcast %cst_20 : f32 to vector<64x1xf32>
    %38 = vector.broadcast %cst_21 : f32 to vector<64x1xf32>
    %39 = arith.select %36, %37, %38 : vector<64x1xi1>, vector<64x1xf32>
    %c0_22 = arith.constant 0 : index
    %c0_23 = arith.constant 0 : index
    %40 = vector.load %arg4[%c0_22, %c0_23] : memref<1x256xf32, #tpu.memory_space<vmem>>, vector<1x256xf32>
    %41 = vector.broadcast %39 : vector<64x1xf32> to vector<64x256xf32>
    %42 = vector.broadcast %40 : vector<1x256xf32> to vector<64x256xf32>
    %43 = arith.mulf %41, %42 : vector<64x256xf32>
    %44 = arith.subf %30, %43 : vector<64x256xf32>
    %c159_i32 = arith.constant 159 : i32
    %45 = vector.broadcast %c159_i32 : i32 to vector<64x1xi32>
    %46 = arith.cmpi eq, %34, %45 : vector<64x1xi32>
    %cst_24 = arith.constant 1.000000e+00 : f32
    %cst_25 = arith.constant 0.000000e+00 : f32
    %47 = vector.broadcast %cst_24 : f32 to vector<64x1xf32>
    %48 = vector.broadcast %cst_25 : f32 to vector<64x1xf32>
    %49 = arith.select %46, %47, %48 : vector<64x1xi1>, vector<64x1xf32>
    %c0_26 = arith.constant 0 : index
    %c0_27 = arith.constant 0 : index
    %50 = vector.load %arg5[%c0_26, %c0_27] : memref<1x256xf32, #tpu.memory_space<vmem>>, vector<1x256xf32>
    %51 = vector.broadcast %49 : vector<64x1xf32> to vector<64x256xf32>
    %52 = vector.broadcast %50 : vector<1x256xf32> to vector<64x256xf32>
    %53 = arith.mulf %51, %52 : vector<64x256xf32>
    %54 = arith.subf %44, %53 : vector<64x256xf32>
    %cst_28 = arith.constant 0.000000e+00 : f32
    %55 = vector.broadcast %cst_28 : f32 to vector<64x256xf32>
    %56 = arith.maximumf %54, %55 : vector<64x256xf32>
    %57 = arith.truncf %56 : vector<64x256xf32> to vector<64x256xbf16>
    %c0_29 = arith.constant 0 : index
    %c0_30 = arith.constant 0 : index
    %58 = vector.load %arg6[%c0_29, %c0_30] : memref<256x128xbf16, #tpu.memory_space<vmem>>, vector<256x128xbf16>
    %cst_31 = arith.constant dense<0.000000e+00> : vector<64x128xf32>
    %59 = tpu.matmul %57, %58, %cst_31 {dimension_numbers = #tpu.dot_dimension_numbers<[1], [0], [0], [1], [0, 0, 1, 1], [], []>} : vector<64x256xbf16>, vector<256x128xbf16>, vector<64x128xf32> -> vector<64x128xf32>
    %c0_32 = arith.constant 0 : index
    %c0_33 = arith.constant 0 : index
    %60 = vector.load %arg7[%c0_32, %c0_33] : memref<1x128xf32, #tpu.memory_space<vmem>>, vector<1x128xf32>
    %61 = vector.broadcast %60 : vector<1x128xf32> to vector<64x128xf32>
    %62 = arith.addf %59, %61 : vector<64x128xf32>
    %cst_34 = arith.constant 0.000000e+00 : f32
    %63 = vector.broadcast %cst_34 : f32 to vector<64x128xf32>
    %64 = arith.maximumf %62, %63 : vector<64x128xf32>
    %65 = arith.truncf %64 : vector<64x128xf32> to vector<64x128xbf16>
    %c0_35 = arith.constant 0 : index
    %c0_36 = arith.constant 0 : index
    %66 = vector.load %arg8[%c0_35, %c0_36] : memref<128x128xbf16, #tpu.memory_space<vmem>>, vector<128x128xbf16>
    %cst_37 = arith.constant dense<0.000000e+00> : vector<64x128xf32>
    %67 = tpu.matmul %65, %66, %cst_37 {dimension_numbers = #tpu.dot_dimension_numbers<[1], [0], [0], [1], [0, 0, 1, 1], [], []>} : vector<64x128xbf16>, vector<128x128xbf16>, vector<64x128xf32> -> vector<64x128xf32>
    %c0_38 = arith.constant 0 : index
    %c0_39 = arith.constant 0 : index
    %68 = vector.load %arg9[%c0_38, %c0_39] : memref<1x128xf32, #tpu.memory_space<vmem>>, vector<1x128xf32>
    %69 = vector.broadcast %68 : vector<1x128xf32> to vector<64x128xf32>
    %70 = arith.addf %67, %69 : vector<64x128xf32>
    %cst_40 = arith.constant 0.000000e+00 : f32
    %71 = vector.broadcast %cst_40 : f32 to vector<64x128xf32>
    %72 = arith.maximumf %70, %71 : vector<64x128xf32>
    %73 = arith.truncf %72 : vector<64x128xf32> to vector<64x128xbf16>
    %c0_41 = arith.constant 0 : index
    %c0_42 = arith.constant 0 : index
    %74 = vector.load %arg10[%c0_41, %c0_42] : memref<128x128xbf16, #tpu.memory_space<vmem>>, vector<128x128xbf16>
    %cst_43 = arith.constant dense<0.000000e+00> : vector<64x128xf32>
    %75 = tpu.matmul %73, %74, %cst_43 {dimension_numbers = #tpu.dot_dimension_numbers<[1], [0], [0], [1], [0, 0, 1, 1], [], []>} : vector<64x128xbf16>, vector<128x128xbf16>, vector<64x128xf32> -> vector<64x128xf32>
    %c0_44 = arith.constant 0 : index
    %c0_45 = arith.constant 0 : index
    %76 = vector.load %arg11[%c0_44, %c0_45] : memref<1x128xf32, #tpu.memory_space<vmem>>, vector<1x128xf32>
    %77 = vector.broadcast %76 : vector<1x128xf32> to vector<64x128xf32>
    %78 = arith.addf %75, %77 : vector<64x128xf32>
    %cst_46 = arith.constant 0.000000e+00 : f32
    %79 = vector.broadcast %cst_46 : f32 to vector<64x128xf32>
    %80 = arith.maximumf %78, %79 : vector<64x128xf32>
    %81 = arith.truncf %80 : vector<64x128xf32> to vector<64x128xbf16>
    %c0_47 = arith.constant 0 : index
    %c0_48 = arith.constant 0 : index
    %82 = vector.load %arg12[%c0_47, %c0_48] : memref<128x1xbf16, #tpu.memory_space<vmem>>, vector<128x1xbf16>
    %cst_49 = arith.constant dense<0.000000e+00> : vector<64x1xf32>
    %83 = tpu.matmul %81, %82, %cst_49 {dimension_numbers = #tpu.dot_dimension_numbers<[1], [0], [0], [1], [0, 0, 1, 1], [], []>} : vector<64x128xbf16>, vector<128x1xbf16>, vector<64x1xf32> -> vector<64x1xf32>
    %c0_50 = arith.constant 0 : index
    %c0_51 = arith.constant 0 : index
    %84 = vector.load %arg13[%c0_50, %c0_51] : memref<1x1xf32, #tpu.memory_space<vmem>>, vector<1x1xf32>
    %85 = vector.broadcast %84 : vector<1x1xf32> to vector<64x1xf32>
    %86 = arith.addf %83, %85 : vector<64x1xf32>
    %87 = arith.negf %86 : vector<64x1xf32>
    %88 = math.exp %87 : vector<64x1xf32>
    %cst_52 = arith.constant 1.000000e+00 : f32
    %89 = vector.broadcast %cst_52 : f32 to vector<64x1xf32>
    %90 = arith.addf %89, %88 : vector<64x1xf32>
    %91 = arith.divf %89, %90 : vector<64x1xf32>
    %c0_53 = arith.constant 0 : index
    %c0_54 = arith.constant 0 : index
    %92 = vector.load %arg14[%c0_53, %c0_54] : memref<64x1xf32, #tpu.memory_space<vmem>>, vector<64x1xf32>
    tpu.vector_store %arg14[%c0_53, %c0_54], %91 {strides = array<i32>} : memref<64x1xf32, #tpu.memory_space<vmem>>, vector<64x1xf32>,
    return
  }
  func.func @transform_0(%arg0: i32) -> (i32, i32, i32) {
    %c0_i32 = arith.constant 0 : i32
    %c0_i32_0 = arith.constant 0 : i32
    %c0_i32_1 = arith.constant 0 : i32
    return %arg0, %c0_i32, %c0_i32_0 : i32, i32, i32
  }
  func.func @transform_1(%arg0: i32) -> (i32, i32, i32) {
    %c0_i32 = arith.constant 0 : i32
    %c0_i32_0 = arith.constant 0 : i32
    %c0_i32_1 = arith.constant 0 : i32
    %c0_i32_2 = arith.constant 0 : i32
    return %c0_i32, %c0_i32_0, %c0_i32_1 : i32, i32, i32
  }
  func.func @transform_2(%arg0: i32) -> (i32, i32) {
    %c0_i32 = arith.constant 0 : i32
    %c0_i32_0 = arith.constant 0 : i32
    %c0_i32_1 = arith.constant 0 : i32
    return %c0_i32, %c0_i32_0 : i32, i32
  }
  func.func @transform_3(%arg0: i32) -> (i32, i32) {
    %c0_i32 = arith.constant 0 : i32
    %c0_i32_0 = arith.constant 0 : i32
    %c0_i32_1 = arith.constant 0 : i32
    return %c0_i32, %c0_i32_0 : i32, i32
  }
  func.func @transform_4(%arg0: i32) -> (i32, i32) {
    %c0_i32 = arith.constant 0 : i32
    %c0_i32_0 = arith.constant 0 : i32
    %c0_i32_1 = arith.constant 0 : i32
    return %c0_i32, %c0_i32_0 : i32, i32
  }
  func.func @transform_5(%arg0: i32) -> (i32, i32) {
    %c0_i32 = arith.constant 0 : i32
    %c0_i32_0 = arith.constant 0 : i32
    %c0_i32_1 = arith.constant 0 : i32
    return %c0_i32, %c0_i32_0 : i32, i32
  }
  func.func @transform_6(%arg0: i32) -> (i32, i32) {
    %c0_i32 = arith.constant 0 : i32
    %c0_i32_0 = arith.constant 0 : i32
    %c0_i32_1 = arith.constant 0 : i32
    return %c0_i32, %c0_i32_0 : i32, i32
  }
  func.func @transform_7(%arg0: i32) -> (i32, i32) {
    %c0_i32 = arith.constant 0 : i32
    %c0_i32_0 = arith.constant 0 : i32
    %c0_i32_1 = arith.constant 0 : i32
    return %c0_i32, %c0_i32_0 : i32, i32
  }
  func.func @transform_8(%arg0: i32) -> (i32, i32) {
    %c0_i32 = arith.constant 0 : i32
    %c0_i32_0 = arith.constant 0 : i32
    %c0_i32_1 = arith.constant 0 : i32
    return %c0_i32, %c0_i32_0 : i32, i32
  }
  func.func @transform_9(%arg0: i32) -> (i32, i32) {
    %c0_i32 = arith.constant 0 : i32
    %c0_i32_0 = arith.constant 0 : i32
    %c0_i32_1 = arith.constant 0 : i32
    return %c0_i32, %c0_i32_0 : i32, i32
  }
  func.func @transform_10(%arg0: i32) -> (i32, i32) {
    %c0_i32 = arith.constant 0 : i32
    %c0_i32_0 = arith.constant 0 : i32
    %c0_i32_1 = arith.constant 0 : i32
    return %c0_i32, %c0_i32_0 : i32, i32
  }
  func.func @transform_11(%arg0: i32) -> (i32, i32) {
    %c0_i32 = arith.constant 0 : i32
    %c0_i32_0 = arith.constant 0 : i32
    %c0_i32_1 = arith.constant 0 : i32
    return %c0_i32, %c0_i32_0 : i32, i32
  }
  func.func @transform_12(%arg0: i32) -> (i32, i32) {
    %c0_i32 = arith.constant 0 : i32
    %c0_i32_0 = arith.constant 0 : i32
    %c0_i32_1 = arith.constant 0 : i32
    return %c0_i32, %c0_i32_0 : i32, i32
  }
  func.func @transform_13(%arg0: i32) -> (i32, i32) {
    %c0_i32 = arith.constant 0 : i32
    %c0_i32_0 = arith.constant 0 : i32
    return %arg0, %c0_i32 : i32, i32
  }
}

</mosaic_0001>

<llo_original>
// kernel: tpu_custom_call.1
$region0: #{tpu_custom_call.1}
  #allocation0 [shape = 'u32[]', space=smem, size = 0x4, offset = 0x4, fixed_abs, tag = 'smem constant byte address 0x4 - core index']
  #allocation1 [shape = 'u32[144,128]{1,0:T(1,128)}', space=vmem, size = 0x12000, scoped, tag = 'internal scratch']
  #allocation2 [shape = 'f32[1,1]{1,0:T(1,128)S(1)}', space=vmem, size = 0x200, scoped, tag = 'scoped memory for tpu_custom_call.1']
  %s0 = inlined_call_operand.vmem [shape: bf16[3,68,8], index: 0, kind: input, shape index: {}]
  %s1 = inlined_call_operand.hbm [shape: bf16[5,8,256], index: 1, kind: input, shape index: {}]
  %s2 = inlined_call_operand.vmem [shape: f32[1,256], index: 2, kind: input, shape index: {}]
  %s3 = inlined_call_operand.vmem [shape: f32[1,256], index: 3, kind: input, shape index: {}]
  %s4 = inlined_call_operand.vmem [shape: f32[1,256], index: 4, kind: input, shape index: {}]
  %s5 = inlined_call_operand.vmem [shape: bf16[256,128], index: 5, kind: input, shape index: {}]
  %s6 = inlined_call_operand.vmem [shape: f32[1,128], index: 6, kind: input, shape index: {}]
  %s7 = inlined_call_operand.vmem [shape: bf16[128,128], index: 7, kind: input, shape index: {}]
  %s8 = inlined_call_operand.vmem [shape: f32[1,128], index: 8, kind: input, shape index: {}]
  %s9 = inlined_call_operand.hbm [shape: bf16[128,128], index: 9, kind: input, shape index: {}]
  %s10 = inlined_call_operand.vmem [shape: f32[1,128], index: 10, kind: input, shape index: {}]
  %s11 = inlined_call_operand.vmem [shape: bf16[128,1], index: 11, kind: input, shape index: {}]
  %s12 = inlined_call_operand.<no memory space> [shape: f32[1,1], index: 12, kind: input, shape index: {}]
  %s13 = inlined_call_operand.vmem [shape: f32[192,1], index: 13, kind: output, shape index: {}]
  %s14 = sld [smem:[#allocation0]]
  $region93: #{tpu_custom_call.1} parent=0
    _
  %s16 = ssub.s32 1, %s14
  %s17 = scalar_select 0, %s16, %s14
  %v18 = vstv %s12
  %19 = vst [vmem:[#allocation2] sm:$0x1] %v18
  $region1: #{tpu_custom_call.1} parent=0
    #allocation3 [shape = 'u8[20480]{0}', space=vmem, size = 0x5000, scoped, tag = 'input window, operand 1, single buffered']
    #allocation4 [shape = 's32[2]{0}', space=sflag, size = 0x8, scoped, tag = 'scoped memory for tpu_custom_call.1']
    #allocation5 [shape = 'u8[32768]{0}', space=vmem, size = 0x8000, scoped, tag = 'input window, operand 9, single buffered']
    #allocation6 [shape = 's32[1]{0}', space=sflag, size = 0x4, scoped, tag = 'scoped memory for tpu_custom_call.1']
    %20 = vsyncpa [#allocation4], 0
    %21 = vsyncpa [#allocation6], 0
    loop: start=0, step=1, limit=5
    $region2: #{tpu_custom_call.1} parent=1 // loop_pre_header
      _
    $region3: #{tpu_custom_call.1} parent=1 // loop_header
      %s23 = sphi 0, %s27
      %p24 = scmp.ge.s32.totalorder %s23, 5
      %s33 = sphi 0, %s35
      %s36 = sphi 0, %s33
      %s37 = sphi 0, %s36
      %s53 = sphi 0, %s37
      %s57 = sphi 0, %s57
      %s59 = sphi 0, %s57
      %s60 = sphi 0, %s59
      %s74 = sphi 0, %s60
      %s78 = sphi 0, %s78
      %s80 = sphi 0, %s78
      %s81 = sphi 0, %s80
      %s95 = sphi 0, %s81
      %s99 = sphi 0, %s99
      %s101 = sphi 0, %s99
      %s102 = sphi 0, %s101
      %s116 = sphi 0, %s102
      %s120 = sphi 0, %s120
      %s122 = sphi 0, %s120
      %s123 = sphi 0, %s122
      %s137 = sphi 0, %s123
      %s141 = sphi 0, %s141
      %s143 = sphi 0, %s141
      %s144 = sphi 0, %s143
      %s158 = sphi 0, %s144
      %s162 = sphi 0, %s162
      %s164 = sphi 0, %s162
      %s165 = sphi 0, %s164
      %s179 = sphi 0, %s165
      %s183 = sphi 0, %s183
      %s185 = sphi 0, %s183
      %s186 = sphi 0, %s185
      %s200 = sphi 0, %s186
      %s204 = sphi 0, %s204
      %s206 = sphi 0, %s204
      %s207 = sphi 0, %s206
      %s221 = sphi 0, %s207
      %s225 = sphi 0, %s225
      %s227 = sphi 0, %s225
      %s228 = sphi 0, %s227
      %s242 = sphi 0, %s228
      %s246 = sphi 0, %s246
      %s248 = sphi 0, %s246
      %s249 = sphi 0, %s248
      %s263 = sphi 0, %s249
      %s267 = sphi 0, %s267
      %s269 = sphi 0, %s267
      %s270 = sphi 0, %s269
      %s284 = sphi 0, %s270
      %s288 = sphi 0, %s288
      %s290 = sphi 0, %s288
      %s291 = sphi 0, %s290
      %s305 = sphi 0, %s291
      %s311 = sphi 0, %s313
      %s314 = sphi 0, %s311
      %s315 = sphi 0, %s314
      %s331 = sphi 0, %s315
    $region4: #{tpu_custom_call.1} parent=1 // loop_header_branch
      %26 = sbr.rel (%p24) target = $region8
    $region5: #{tpu_custom_call.1} parent=1 // loop_body
      %s28 = ssub.s32 %s23, 1
      %s29 = ssub.s32 %s23, 2
      %s30 = sadd.s32 %s23, 1
      %s31 = ssub.s32 %s23, %s30
      %p32 = scmp.eq.s32.totalorder %s31, 0
      %s34 = sadd.s32 %s33, 1
      %s35 = scalar_select %p32, %s33, %s34
      %p38 = pneg %p32
      %p39 = scmp.eq.s32.totalorder %s23, 2
      %p40 = por %p38, %p39
      %p41 = scmp.ne.s32.totalorder %s33, %s36
      %p42 = scmp.eq.s32.totalorder %s23, 0
      %p43 = por %p41, %p42
      %p44 = scmp.ne.s32.totalorder %s33, %s36
      %p45 = scmp.eq.s32.totalorder %s28, 2
      %p46 = por %p44, %p45
      %p47 = scmp.ne.s32.totalorder %s36, %s37
      %p48 = scmp.eq.s32.totalorder %s28, 0
      %p49 = por %p47, %p48
      %p50 = scmp.ne.s32.totalorder %s36, %s37
      %p51 = scmp.eq.s32.totalorder %s29, 2
      %p52 = por %p50, %p51
      %p54 = scmp.ne.s32.totalorder %s37, %s53
      %p55 = scmp.eq.s32.totalorder %s29, 0
      %p56 = por %p54, %p55
      %s58 = sadd.s32 %s57, 1
      %p61 = scmp.eq.s32.totalorder %s23, 2
      %p62 = scmp.ne.s32.totalorder %s57, %s59
      %p63 = scmp.eq.s32.totalorder %s23, 0
      %p64 = por %p62, %p63
      %p65 = scmp.ne.s32.totalorder %s57, %s59
      %p66 = scmp.eq.s32.totalorder %s28, 2
      %p67 = por %p65, %p66
      %p68 = scmp.ne.s32.totalorder %s59, %s60
      %p69 = scmp.eq.s32.totalorder %s28, 0
      %p70 = por %p68, %p69
      %p71 = scmp.ne.s32.totalorder %s59, %s60
      %p72 = scmp.eq.s32.totalorder %s29, 2
      %p73 = por %p71, %p72
      %p75 = scmp.ne.s32.totalorder %s60, %s74
      %p76 = scmp.eq.s32.totalorder %s29, 0
      %p77 = por %p75, %p76
      %s79 = sadd.s32 %s78, 1
      %p82 = scmp.eq.s32.totalorder %s23, 2
      %p83 = scmp.ne.s32.totalorder %s78, %s80
      %p84 = scmp.eq.s32.totalorder %s23, 0
      %p85 = por %p83, %p84
      %p86 = scmp.ne.s32.totalorder %s78, %s80
      %p87 = scmp.eq.s32.totalorder %s28, 2
      %p88 = por %p86, %p87
      %p89 = scmp.ne.s32.totalorder %s80, %s81
      %p90 = scmp.eq.s32.totalorder %s28, 0
      %p91 = por %p89, %p90
      %p92 = scmp.ne.s32.totalorder %s80, %s81
      %p93 = scmp.eq.s32.totalorder %s29, 2
      %p94 = por %p92, %p93
      %p96 = scmp.ne.s32.totalorder %s81, %s95
      %p97 = scmp.eq.s32.totalorder %s29, 0
      %p98 = por %p96, %p97
      %s100 = sadd.s32 %s99, 1
      %p103 = scmp.eq.s32.totalorder %s23, 2
      %p104 = scmp.ne.s32.totalorder %s99, %s101
      %p105 = scmp.eq.s32.totalorder %s23, 0
      %p106 = por %p104, %p105
      %p107 = scmp.ne.s32.totalorder %s99, %s101
      %p108 = scmp.eq.s32.totalorder %s28, 2
      %p109 = por %p107, %p108
      %p110 = scmp.ne.s32.totalorder %s101, %s102
      %p111 = scmp.eq.s32.totalorder %s28, 0
      %p112 = por %p110, %p111
      %p113 = scmp.ne.s32.totalorder %s101, %s102
      %p114 = scmp.eq.s32.totalorder %s29, 2
      %p115 = por %p113, %p114
      %p117 = scmp.ne.s32.totalorder %s102, %s116
      %p118 = scmp.eq.s32.totalorder %s29, 0
      %p119 = por %p117, %p118
      %s121 = sadd.s32 %s120, 1
      %p124 = scmp.eq.s32.totalorder %s23, 2
      %p125 = scmp.ne.s32.totalorder %s120, %s122
      %p126 = scmp.eq.s32.totalorder %s23, 0
      %p127 = por %p125, %p126
      %p128 = scmp.ne.s32.totalorder %s120, %s122
      %p129 = scmp.eq.s32.totalorder %s28, 2
      %p130 = por %p128, %p129
      %p131 = scmp.ne.s32.totalorder %s122, %s123
      %p132 = scmp.eq.s32.totalorder %s28, 0
      %p133 = por %p131, %p132
      %p134 = scmp.ne.s32.totalorder %s122, %s123
      %p135 = scmp.eq.s32.totalorder %s29, 2
      %p136 = por %p134, %p135
      %p138 = scmp.ne.s32.totalorder %s123, %s137
      %p139 = scmp.eq.s32.totalorder %s29, 0
      %p140 = por %p138, %p139
      %s142 = sadd.s32 %s141, 1
      %p145 = scmp.eq.s32.totalorder %s23, 2
      %p146 = scmp.ne.s32.totalorder %s141, %s143
      %p147 = scmp.eq.s32.totalorder %s23, 0
      %p148 = por %p146, %p147
      %p149 = scmp.ne.s32.totalorder %s141, %s143
      %p150 = scmp.eq.s32.totalorder %s28, 2
      %p151 = por %p149, %p150
      %p152 = scmp.ne.s32.totalorder %s143, %s144
      %p153 = scmp.eq.s32.totalorder %s28, 0
      %p154 = por %p152, %p153
      %p155 = scmp.ne.s32.totalorder %s143, %s144
      %p156 = scmp.eq.s32.totalorder %s29, 2
      %p157 = por %p155, %p156
      %p159 = scmp.ne.s32.totalorder %s144, %s158
      %p160 = scmp.eq.s32.totalorder %s29, 0
      %p161 = por %p159, %p160
      %s163 = sadd.s32 %s162, 1
      %p166 = scmp.eq.s32.totalorder %s23, 2
      %p167 = scmp.ne.s32.totalorder %s162, %s164
      %p168 = scmp.eq.s32.totalorder %s23, 0
      %p169 = por %p167, %p168
      %p170 = scmp.ne.s32.totalorder %s162, %s164
      %p171 = scmp.eq.s32.totalorder %s28, 2
      %p172 = por %p170, %p171
      %p173 = scmp.ne.s32.totalorder %s164, %s165
      %p174 = scmp.eq.s32.totalorder %s28, 0
      %p175 = por %p173, %p174
      %p176 = scmp.ne.s32.totalorder %s164, %s165
      %p177 = scmp.eq.s32.totalorder %s29, 2
      %p178 = por %p176, %p177
      %p180 = scmp.ne.s32.totalorder %s165, %s179
      %p181 = scmp.eq.s32.totalorder %s29, 0
      %p182 = por %p180, %p181
      %s184 = sadd.s32 %s183, 1
      %p187 = scmp.eq.s32.totalorder %s23, 2
      %p188 = scmp.ne.s32.totalorder %s183, %s185
      %p189 = scmp.eq.s32.totalorder %s23, 0
      %p190 = por %p188, %p189
      %p191 = scmp.ne.s32.totalorder %s183, %s185
      %p192 = scmp.eq.s32.totalorder %s28, 2
      %p193 = por %p191, %p192
      %p194 = scmp.ne.s32.totalorder %s185, %s186
      %p195 = scmp.eq.s32.totalorder %s28, 0
      %p196 = por %p194, %p195
      %p197 = scmp.ne.s32.totalorder %s185, %s186
      %p198 = scmp.eq.s32.totalorder %s29, 2
      %p199 = por %p197, %p198
      %p201 = scmp.ne.s32.totalorder %s186, %s200
      %p202 = scmp.eq.s32.totalorder %s29, 0
      %p203 = por %p201, %p202
      %s205 = sadd.s32 %s204, 1
      %p208 = scmp.eq.s32.totalorder %s23, 2
      %p209 = scmp.ne.s32.totalorder %s204, %s206
      %p210 = scmp.eq.s32.totalorder %s23, 0
      %p211 = por %p209, %p210
      %p212 = scmp.ne.s32.totalorder %s204, %s206
      %p213 = scmp.eq.s32.totalorder %s28, 2
      %p214 = por %p212, %p213
      %p215 = scmp.ne.s32.totalorder %s206, %s207
      %p216 = scmp.eq.s32.totalorder %s28, 0
      %p217 = por %p215, %p216
      %p218 = scmp.ne.s32.totalorder %s206, %s207
      %p219 = scmp.eq.s32.totalorder %s29, 2
      %p220 = por %p218, %p219
      %p222 = scmp.ne.s32.totalorder %s207, %s221
      %p223 = scmp.eq.s32.totalorder %s29, 0
      %p224 = por %p222, %p223
      %s226 = sadd.s32 %s225, 1
      %p229 = scmp.eq.s32.totalorder %s23, 2
      %p230 = scmp.ne.s32.totalorder %s225, %s227
      %p231 = scmp.eq.s32.totalorder %s23, 0
      %p232 = por %p230, %p231
      %p233 = scmp.ne.s32.totalorder %s225, %s227
      %p234 = scmp.eq.s32.totalorder %s28, 2
      %p235 = por %p233, %p234
      %p236 = scmp.ne.s32.totalorder %s227, %s228
      %p237 = scmp.eq.s32.totalorder %s28, 0
      %p238 = por %p236, %p237
      %p239 = scmp.ne.s32.totalorder %s227, %s228
      %p240 = scmp.eq.s32.totalorder %s29, 2
      %p241 = por %p239, %p240
      %p243 = scmp.ne.s32.totalorder %s228, %s242
      %p244 = scmp.eq.s32.totalorder %s29, 0
      %p245 = por %p243, %p244
      %s247 = sadd.s32 %s246, 1
      %p250 = scmp.eq.s32.totalorder %s23, 2
      %p251 = scmp.ne.s32.totalorder %s246, %s248
      %p252 = scmp.eq.s32.totalorder %s23, 0
      %p253 = por %p251, %p252
      %p254 = scmp.ne.s32.totalorder %s246, %s248
      %p255 = scmp.eq.s32.totalorder %s28, 2
      %p256 = por %p254, %p255
      %p257 = scmp.ne.s32.totalorder %s248, %s249
      %p258 = scmp.eq.s32.totalorder %s28, 0
      %p259 = por %p257, %p258
      %p260 = scmp.ne.s32.totalorder %s248, %s249
      %p261 = scmp.eq.s32.totalorder %s29, 2
      %p262 = por %p260, %p261
      %p264 = scmp.ne.s32.totalorder %s249, %s263
      %p265 = scmp.eq.s32.totalorder %s29, 0
      %p266 = por %p264, %p265
      %s268 = sadd.s32 %s267, 1
      %p271 = scmp.eq.s32.totalorder %s23, 2
      %p272 = scmp.ne.s32.totalorder %s267, %s269
      %p273 = scmp.eq.s32.totalorder %s23, 0
      %p274 = por %p272, %p273
      %p275 = scmp.ne.s32.totalorder %s267, %s269
      %p276 = scmp.eq.s32.totalorder %s28, 2
      %p277 = por %p275, %p276
      %p278 = scmp.ne.s32.totalorder %s269, %s270
      %p279 = scmp.eq.s32.totalorder %s28, 0
      %p280 = por %p278, %p279
      %p281 = scmp.ne.s32.totalorder %s269, %s270
      %p282 = scmp.eq.s32.totalorder %s29, 2
      %p283 = por %p281, %p282
      %p285 = scmp.ne.s32.totalorder %s270, %s284
      %p286 = scmp.eq.s32.totalorder %s29, 0
      %p287 = por %p285, %p286
      %s289 = sadd.s32 %s288, 1
      %p292 = scmp.eq.s32.totalorder %s23, 2
      %p293 = scmp.ne.s32.totalorder %s288, %s290
      %p294 = scmp.eq.s32.totalorder %s23, 0
      %p295 = por %p293, %p294
      %p296 = scmp.ne.s32.totalorder %s288, %s290
      %p297 = scmp.eq.s32.totalorder %s28, 2
      %p298 = por %p296, %p297
      %p299 = scmp.ne.s32.totalorder %s290, %s291
      %p300 = scmp.eq.s32.totalorder %s28, 0
      %p301 = por %p299, %p300
      %p302 = scmp.ne.s32.totalorder %s290, %s291
      %p303 = scmp.eq.s32.totalorder %s29, 2
      %p304 = por %p302, %p303
      %p306 = scmp.ne.s32.totalorder %s291, %s305
      %p307 = scmp.eq.s32.totalorder %s29, 0
      %p308 = por %p306, %p307
      %s309 = ssub.s32 %s23, %s30
      %p310 = scmp.eq.s32.totalorder %s309, 0
      %s312 = sadd.s32 %s311, 1
      %s313 = scalar_select %p310, %s311, %s312
      %p316 = pneg %p310
      %p317 = scmp.eq.s32.totalorder %s23, 2
      %p318 = por %p316, %p317
      %p319 = scmp.ne.s32.totalorder %s311, %s314
      %p320 = scmp.eq.s32.totalorder %s23, 0
      %p321 = por %p319, %p320
      %p322 = scmp.ne.s32.totalorder %s311, %s314
      %p323 = scmp.eq.s32.totalorder %s28, 2
      %p324 = por %p322, %p323
      %p325 = scmp.ne.s32.totalorder %s314, %s315
      %p326 = scmp.eq.s32.totalorder %s28, 0
      %p327 = por %p325, %p326
      %p328 = scmp.ne.s32.totalorder %s314, %s315
      %p329 = scmp.eq.s32.totalorder %s29, 2
      %p330 = por %p328, %p329
      %p332 = scmp.ne.s32.totalorder %s315, %s331
      %p333 = scmp.eq.s32.totalorder %s29, 0
      %p334 = por %p332, %p333
      %p335 = scmp.le.s32.totalorder 1, %s23
      %p336 = scmp.lt.s32.totalorder %s23, 4
      %p337 = pnand %p335, %p336
      %p338 = pneg %p337
      // Predicated region
      $region9: #{tpu_custom_call.1} parent=5 // pred_check
        _
      $region10: #{tpu_custom_call.1} parent=5 // pred_check_branch
        %340 = sbr.rel (%p337) target = $region12
      $region11: #{tpu_custom_call.1} parent=5 // pred_region
        %s341 = ssub.s32 %s23, 1
        // Predicated region
        $region13: #{tpu_custom_call.1} parent=11 // pred_check
          %p342 = pneg %p70
        $region14: #{tpu_custom_call.1} parent=11 // pred_check_branch
          %344 = sbr.rel (%p342) target = $region16
        $region15: #{tpu_custom_call.1} parent=11 // pred_region
          %s346 = ssub.s32 640, 640
          %347 = vsyncadd [#allocation4], %s346
          %s348 = sshll.u32 [#allocation3], 4
          %s349 = int_to_ptr.vmem [resolvable:$true] %s348
          %354 = dma.hbm_to_vmem [thread:$0]  %s1, 640, %s349, [#allocation4], 128, 128, 8
        $region16: #{tpu_custom_call.1} parent=11 // pred_fallthru
          _
        // Predicated region
        $region17: #{tpu_custom_call.1} parent=11 // pred_check
          %p355 = pneg %p91
        $region18: #{tpu_custom_call.1} parent=11 // pred_check_branch
          %357 = sbr.rel (%p355) target = $region20
        $region19: #{tpu_custom_call.1} parent=11 // pred_region
          _
        $region20: #{tpu_custom_call.1} parent=11 // pred_fallthru
          _
        // Predicated region
        $region21: #{tpu_custom_call.1} parent=11 // pred_check
          %p358 = pneg %p112
        $region22: #{tpu_custom_call.1} parent=11 // pred_check_branch
          %360 = sbr.rel (%p358) target = $region24
        $region23: #{tpu_custom_call.1} parent=11 // pred_region
          _
        $region24: #{tpu_custom_call.1} parent=11 // pred_fallthru
          _
        // Predicated region
        $region25: #{tpu_custom_call.1} parent=11 // pred_check
          %p361 = pneg %p133
        $region26: #{tpu_custom_call.1} parent=11 // pred_check_branch
          %363 = sbr.rel (%p361) target = $region28
        $region27: #{tpu_custom_call.1} parent=11 // pred_region
          _
        $region28: #{tpu_custom_call.1} parent=11 // pred_fallthru
          _
        // Predicated region
        $region29: #{tpu_custom_call.1} parent=11 // pred_check
          %p364 = pneg %p154
        $region30: #{tpu_custom_call.1} parent=11 // pred_check_branch
          %366 = sbr.rel (%p364) target = $region32
        $region31: #{tpu_custom_call.1} parent=11 // pred_region
          _
        $region32: #{tpu_custom_call.1} parent=11 // pred_fallthru
          _
        // Predicated region
        $region33: #{tpu_custom_call.1} parent=11 // pred_check
          %p367 = pneg %p175
        $region34: #{tpu_custom_call.1} parent=11 // pred_check_branch
          %369 = sbr.rel (%p367) target = $region36
        $region35: #{tpu_custom_call.1} parent=11 // pred_region
          _
        $region36: #{tpu_custom_call.1} parent=11 // pred_fallthru
          _
        // Predicated region
        $region37: #{tpu_custom_call.1} parent=11 // pred_check
          %p370 = pneg %p196
        $region38: #{tpu_custom_call.1} parent=11 // pred_check_branch
          %372 = sbr.rel (%p370) target = $region40
        $region39: #{tpu_custom_call.1} parent=11 // pred_region
          _
        $region40: #{tpu_custom_call.1} parent=11 // pred_fallthru
          _
        // Predicated region
        $region41: #{tpu_custom_call.1} parent=11 // pred_check
          %p373 = pneg %p217
        $region42: #{tpu_custom_call.1} parent=11 // pred_check_branch
          %375 = sbr.rel (%p373) target = $region44
        $region43: #{tpu_custom_call.1} parent=11 // pred_region
          _
        $region44: #{tpu_custom_call.1} parent=11 // pred_fallthru
          _
        // Predicated region
        $region45: #{tpu_custom_call.1} parent=11 // pred_check
          %p376 = pneg %p238
        $region46: #{tpu_custom_call.1} parent=11 // pred_check_branch
          %378 = sbr.rel (%p376) target = $region48
        $region47: #{tpu_custom_call.1} parent=11 // pred_region
          %s380 = ssub.s32 1024, 1024
          %381 = vsyncadd [#allocation6], %s380
          %s382 = sshll.u32 [#allocation5], 4
          %s383 = int_to_ptr.vmem [resolvable:$true] %s382
          %388 = dma.hbm_to_vmem [thread:$0]  %s9, 1024, %s383, [#allocation6], 64, 64, 4
        $region48: #{tpu_custom_call.1} parent=11 // pred_fallthru
          _
        // Predicated region
        $region49: #{tpu_custom_call.1} parent=11 // pred_check
          %p389 = pneg %p259
        $region50: #{tpu_custom_call.1} parent=11 // pred_check_branch
          %391 = sbr.rel (%p389) target = $region52
        $region51: #{tpu_custom_call.1} parent=11 // pred_region
          _
        $region52: #{tpu_custom_call.1} parent=11 // pred_fallthru
          _
        // Predicated region
        $region53: #{tpu_custom_call.1} parent=11 // pred_check
          %p392 = pneg %p280
        $region54: #{tpu_custom_call.1} parent=11 // pred_check_branch
          %394 = sbr.rel (%p392) target = $region56
        $region55: #{tpu_custom_call.1} parent=11 // pred_region
          _
        $region56: #{tpu_custom_call.1} parent=11 // pred_fallthru
          _
        // Predicated region
        $region57: #{tpu_custom_call.1} parent=11 // pred_check
          %p395 = pneg %p301
        $region58: #{tpu_custom_call.1} parent=11 // pred_check_branch
          %397 = sbr.rel (%p395) target = $region60
        $region59: #{tpu_custom_call.1} parent=11 // pred_region
          _
        $region60: #{tpu_custom_call.1} parent=11 // pred_fallthru
          _
      $region12: #{tpu_custom_call.1} parent=5 // pred_fallthru
        _
      %p398 = scmp.lt.s32.totalorder %s23, 3
      // Predicated region
      $region61: #{tpu_custom_call.1} parent=5 // pred_check
        %p399 = pneg %p398
      $region62: #{tpu_custom_call.1} parent=5 // pred_check_branch
        %401 = sbr.rel (%p399) target = $region64
      $region63: #{tpu_custom_call.1} parent=5 // pred_region
        // Predicated region
        $region65: #{tpu_custom_call.1} parent=63 // pred_check
          %p402 = pneg %p43
        $region66: #{tpu_custom_call.1} parent=63 // pred_check_branch
          %404 = sbr.rel (%p402) target = $region68
        $region67: #{tpu_custom_call.1} parent=63 // pred_region
          %p405 = scmp.lt.s32.totalorder %s23, 2
          %s406 = scalar_select %p405, %s23, 2
          %s407 = smul.addr %s406, 9
          %s408 = smul.addr %s407, 4
          %s409 = scalar_lea.vmem %s0, %s408
        $region68: #{tpu_custom_call.1} parent=63 // pred_fallthru
          _
      $region64: #{tpu_custom_call.1} parent=5 // pred_fallthru
        _
      %p410 = scmp.le.s32.totalorder 1, %s23
      %p411 = scmp.lt.s32.totalorder %s23, 4
      %p412 = pnand %p410, %p411
      %p413 = pneg %p412
      // Predicated region
      $region69: #{tpu_custom_call.1} parent=5 // pred_check
        _
      $region70: #{tpu_custom_call.1} parent=5 // pred_check_branch
        %415 = sbr.rel (%p412) target = $region72
      $region71: #{tpu_custom_call.1} parent=5 // pred_region
        %s416 = ssub.s32 %s23, 1
        // Predicated region
        $region73: #{tpu_custom_call.1} parent=71 // pred_check
          %p417 = pneg %p70
        $region74: #{tpu_custom_call.1} parent=71 // pred_check_branch
          %419 = sbr.rel (%p417) target = $region76
        $region75: #{tpu_custom_call.1} parent=71 // pred_region
          %420 = dma.done [#allocation4], 640
        $region76: #{tpu_custom_call.1} parent=71 // pred_fallthru
          _
        // Predicated region
        $region77: #{tpu_custom_call.1} parent=71 // pred_check
          %p421 = pneg %p238
        $region78: #{tpu_custom_call.1} parent=71 // pred_check_branch
          %423 = sbr.rel (%p421) target = $region80
        $region79: #{tpu_custom_call.1} parent=71 // pred_region
          %424 = dma.done [#allocation6], 1024
        $region80: #{tpu_custom_call.1} parent=71 // pred_fallthru
          _
        %p425 = scmp.lt.s32.totalorder %s28, 2
        %s426 = scalar_select %p425, %s28, 2
        %s427 = smul.addr %s426, 9
        %s428 = smul.addr %s427, 4
        %s429 = scalar_lea.vmem %s0, %s428
        %p430 = pneg %p49
        %p431 = pneg %p46
        %p432 = pneg %p70
        %p433 = pneg %p67
        %p434 = pneg %p91
        %p435 = pneg %p88
        %p436 = pneg %p112
        %p437 = pneg %p109
        %p438 = pneg %p133
        %p439 = pneg %p130
        %p440 = pneg %p154
        %p441 = pneg %p151
        %p442 = pneg %p175
        %p443 = pneg %p172
        %p444 = pneg %p196
        %p445 = pneg %p193
        %p446 = pneg %p217
        %p447 = pneg %p214
        %p448 = pneg %p238
        %p449 = pneg %p235
        %p450 = pneg %p259
        %p451 = pneg %p256
        %p452 = pneg %p280
        %p453 = pneg %p277
        %p454 = pneg %p301
        %p455 = pneg %p298
        %p456 = pneg %p327
        %p457 = pneg %p324
        %s458 = smul.u32 8, %s28
        %p459 = scmp.lt.s32.totalorder %s458, 23
        %s460 = scalar_select %p459, %s458, 23
        %s461 = smul.addr %s460, 8
        %s462 = scalar_lea.vmem %s13, %s461
        %p463 = scmp.lt.s32.totalorder %s28, 2
        %s464 = scalar_select %p463, %s28, 2
        %s465 = smul.addr %s464, 9
        %s466 = smul.addr %s465, 4
        %s467 = scalar_lea.vmem %s0, %s466
        %s468 = smul.u32 8, %s28
        %p469 = scmp.lt.s32.totalorder %s468, 23
        %s470 = scalar_select %p469, %s468, 23
        %s471 = smul.addr %s470, 8
        %s472 = scalar_lea.vmem %s13, %s471
        %s473 = smul.u32 8, %s28
        %v475 = vld [vmem:[%s467] sm:$0xf]
        %v476 = vld [vmem:[%s467 + $0x4] sm:$0xf]
        %v477 = vld [vmem:[%s467 + $0x8] sm:$0xf]
        %v478 = vld [vmem:[%s467 + $0xc] sm:$0xf]
        %v479 = vld [vmem:[%s467 + $0x10] sm:$0xf]
        %v480 = vld [vmem:[%s467 + $0x14] sm:$0xf]
        %v481 = vld [vmem:[%s467 + $0x18] sm:$0xf]
        %v482 = vld [vmem:[%s467 + $0x1c] sm:$0xf]
        %v483 = vld [vmem:[%s467 + $0x20] sm:$0x3]
        %v484 = vmax.bf16 %v475, 0
        %v485 = vmax.bf16 %v476, 0
        %v486 = vmax.bf16 %v477, 0
        %v487 = vmax.bf16 %v478, 0
        %v488 = vmax.bf16 %v479, 0
        %v489 = vmax.bf16 %v480, 0
        %v490 = vmax.bf16 %v481, 0
        %v491 = vmax.bf16 %v482, 0
        %v492 = vmax.bf16 %v483, 0
        %v493 = vld [vmem:[#allocation3] sm:$0xff]
        %s494 = scalar_lea.vmem [#allocation3], 8
        %v495 = vld [vmem:[%s494] sm:$0xff]
        %v505 = vunpack.c.l.b16 %v484
        %v506 = vunpack.c.l.b16 %v485
        %v507 = vunpack.c.l.b16 %v486
        %v508 = vunpack.c.l.b16 %v487
        %v509 = vunpack.c.l.b16 %v488
        %v510 = vunpack.c.l.b16 %v489
        %v511 = vunpack.c.l.b16 %v490
        %v512 = vunpack.c.l.b16 %v491
        %v513 = vunpack.c.l.b16 %v492
        %v514 = vpack.c.b16 %v506, %v505
        %v515 = vpack.c.b16 %v508, %v507
        %v516 = vpack.c.b16 %v510, %v509
        %v517 = vpack.c.b16 %v512, %v511
        %v518 = vpack.c.b16 %v513, %v513
        %vm519 = vsmask.f32 7424
        %v521 = vshrl.u32 %v514, 16
        %v523 = vshll.u32 %v514, 16
        %v525 = vrot.slane %v523, 1
        %v526 = vor.u32 %v521, %v525
        %v528 = vshll.u32 %v515, 16
        %v530 = vrot.slane %v528, 1
        %v531 = vsel %vm519, %v526, %v530
        %v532 = vshrl.u32 %v515, 16
        %v534 = vor.u32 %v532, %v530
        %v536 = vshll.u32 %v516, 16
        %v538 = vrot.slane %v536, 1
        %v539 = vsel %vm519, %v534, %v538
        %v540 = vshrl.u32 %v516, 16
        %v542 = vor.u32 %v540, %v538
        %v544 = vshll.u32 %v517, 16
        %v546 = vrot.slane %v544, 1
        %v547 = vsel %vm519, %v542, %v546
        %v548 = vshrl.u32 %v517, 16
        %v550 = vor.u32 %v548, %v546
        %v552 = vshll.u32 %v518, 16
        %v554 = vrot.slane %v552, 1
        %v555 = vsel %vm519, %v550, %v554
        %v557 = vunpack.c.l.b16 %v495
        %v558 = vunpack.c.h.b16 %v495
        %v559 = vpack.c.b16 %v557, %v557
        %v560 = vpack.c.b16 %v558, %v558
        %vm561 = vcmask 64512
        %v563 = vsel %vm561, %v531, 0
        %v566 = vsel %vm561, %v539, 0
        %v569 = vsel %vm561, %v547, 0
        %v572 = vsel %vm561, %v555, 0
        %vm574 = vcmask 1043456
        %v576 = vsel %vm574, %v559, 0
        %v579 = vsel %vm574, %v560, 0
        %581 = vmatprep.subr.bf16.mxu0 %v579
        %582 = vmatpush1.bf16.msra.mxu0 %v576
        %583 = vmatprep.subr.bf16.mxu0 0
        %584 = vmatpush1.bf16.msra.mxu0 0
        %585 = vmatprep.subr.bf16.mxu0 0
        %586 = vmatpush1.bf16.msra.mxu0 0
        %587 = vmatprep.subr.bf16.mxu0 0
        %588 = vmatpush1.bf16.msra.mxu0 0
        %589 = vmatprep.subr.bf16.mxu0 0
        %590 = vmatpush1.bf16.msra.mxu0 0
        %591 = vmatprep.subr.bf16.mxu0 0
        %592 = vmatpush1.bf16.msra.mxu0 0
        %593 = vmatprep.subr.bf16.mxu0 0
        %594 = vmatpush1.bf16.msra.mxu0 0
        %595 = vmatprep.subr.bf16.mxu0 0
        %596 = vmatpush1.bf16.msra.mxu0 0
        %597 = vmatprep.subr.bf16.mxu0 0
        %598 = vmatpush1.bf16.msra.mxu0 0
        %599 = vmatprep.subr.bf16.mxu0 0
        %600 = vmatpush1.bf16.msra.mxu0 0
        %601 = vmatprep.subr.bf16.mxu0 0
        %602 = vmatpush1.bf16.msra.mxu0 0
        %603 = vmatprep.subr.bf16.mxu0 0
        %604 = vmatpush1.bf16.msra.mxu0 0
        %605 = vmatprep.subr.bf16.mxu0 0
        %606 = vmatpush1.bf16.msra.mxu0 0
        %607 = vmatprep.subr.bf16.mxu0 0
        %608 = vmatpush1.bf16.msra.mxu0 0
        %609 = vmatprep.subr.bf16.mxu0 0
        %610 = vmatpush1.bf16.msra.mxu0 0
        %611 = vmatprep.subr.bf16.mxu0 0
        %612 = vmatpush1.bf16.msra.mxu0 0
        %613 = vmatprep.mubr.bf16.mxu0 0
        %614 = vmatmul.mubr.bf16.gmra.mrb[0].mxu0 %v563
        %v615 = vpop.f32.mrb[0].mxu0
        %v616 = vadd.f32 0.0, %v615
        %v617 = vpop.f32.mrb[0].mxu0
        %v618 = vadd.f32 0.0, %v617
        %v619 = vpop.f32.mrb[0].mxu0
        %v620 = vadd.f32 0.0, %v619
        %v621 = vpop.f32.mrb[0].mxu0
        %v622 = vadd.f32 0.0, %v621
        %623 = vmatprep.mubr.bf16.mxu0 0
        %624 = vmatmul.mubr.bf16.gmra.mrb[0].mxu0 %v566
        %v625 = vpop.f32.mrb[0].mxu0
        %v626 = vadd.f32 0.0, %v625
        %v627 = vpop.f32.mrb[0].mxu0
        %v628 = vadd.f32 0.0, %v627
        %v629 = vpop.f32.mrb[0].mxu0
        %v630 = vadd.f32 0.0, %v629
        %v631 = vpop.f32.mrb[0].mxu0
        %v632 = vadd.f32 0.0, %v631
        %633 = vmatprep.mubr.bf16.mxu0 0
        %634 = vmatmul.mubr.bf16.gmra.mrb[0].mxu0 %v569
        %v635 = vpop.f32.mrb[0].mxu0
        %v636 = vadd.f32 0.0, %v635
        %v637 = vpop.f32.mrb[0].mxu0
        %v638 = vadd.f32 0.0, %v637
        %v639 = vpop.f32.mrb[0].mxu0
        %v640 = vadd.f32 0.0, %v639
        %v641 = vpop.f32.mrb[0].mxu0
        %v642 = vadd.f32 0.0, %v641
        %643 = vmatprep.mubr.bf16.mxu0 0
        %644 = vmatmul.mubr.bf16.gmra.mrb[0].mxu0 %v572
        %v645 = vpop.f32.mrb[0].mxu0
        %v646 = vadd.f32 0.0, %v645
        %v647 = vpop.f32.mrb[0].mxu0
        %v648 = vadd.f32 0.0, %v647
        %v649 = vpop.f32.mrb[0].mxu0
        %v650 = vadd.f32 0.0, %v649
        %v651 = vpop.f32.mrb[0].mxu0
        %v652 = vadd.f32 0.0, %v651
        %653 = vdwg.mxu0
        %v655 = vunpack.c.l.b16 %v493
        %v656 = vunpack.c.h.b16 %v493
        %v657 = vpack.c.b16 %v655, %v655
        %v658 = vpack.c.b16 %v656, %v656
        %v659 = vsel %vm561, %v514, 0
        %v661 = vsel %vm561, %v515, 0
        %v663 = vsel %vm561, %v516, 0
        %v665 = vsel %vm561, %v517, 0
        %v668 = vsel %vm574, %v657, 0
        %v671 = vsel %vm574, %v658, 0
        %673 = vmatprep.subr.bf16.mxu0 %v671
        %674 = vmatpush1.bf16.msra.mxu0 %v668
        %675 = vmatprep.subr.bf16.mxu0 0
        %676 = vmatpush1.bf16.msra.mxu0 0
        %677 = vmatprep.subr.bf16.mxu0 0
        %678 = vmatpush1.bf16.msra.mxu0 0
        %679 = vmatprep.subr.bf16.mxu0 0
        %680 = vmatpush1.bf16.msra.mxu0 0
        %681 = vmatprep.subr.bf16.mxu0 0
        %682 = vmatpush1.bf16.msra.mxu0 0
        %683 = vmatprep.subr.bf16.mxu0 0
        %684 = vmatpush1.bf16.msra.mxu0 0
        %685 = vmatprep.subr.bf16.mxu0 0
        %686 = vmatpush1.bf16.msra.mxu0 0
        %687 = vmatprep.subr.bf16.mxu0 0
        %688 = vmatpush1.bf16.msra.mxu0 0
        %689 = vmatprep.subr.bf16.mxu0 0
        %690 = vmatpush1.bf16.msra.mxu0 0
        %691 = vmatprep.subr.bf16.mxu0 0
        %692 = vmatpush1.bf16.msra.mxu0 0
        %693 = vmatprep.subr.bf16.mxu0 0
        %694 = vmatpush1.bf16.msra.mxu0 0
        %695 = vmatprep.subr.bf16.mxu0 0
        %696 = vmatpush1.bf16.msra.mxu0 0
        %697 = vmatprep.subr.bf16.mxu0 0
        %698 = vmatpush1.bf16.msra.mxu0 0
        %699 = vmatprep.subr.bf16.mxu0 0
        %700 = vmatpush1.bf16.msra.mxu0 0
        %701 = vmatprep.subr.bf16.mxu0 0
        %702 = vmatpush1.bf16.msra.mxu0 0
        %703 = vmatprep.subr.bf16.mxu0 0
        %704 = vmatpush1.bf16.msra.mxu0 0
        %705 = vmatprep.mubr.bf16.mxu0 0
        %706 = vmatmul.mubr.bf16.gmra.mrb[0].mxu0 %v659
        %v707 = vpop.f32.mrb[0].mxu0
        %v708 = vadd.f32 %v616, %v707
        %v709 = vpop.f32.mrb[0].mxu0
        %v710 = vadd.f32 %v618, %v709
        %v711 = vpop.f32.mrb[0].mxu0
        %v712 = vadd.f32 %v620, %v711
        %v713 = vpop.f32.mrb[0].mxu0
        %v714 = vadd.f32 %v622, %v713
        %715 = vmatprep.mubr.bf16.mxu0 0
        %716 = vmatmul.mubr.bf16.gmra.mrb[0].mxu0 %v661
        %v717 = vpop.f32.mrb[0].mxu0
        %v718 = vadd.f32 %v626, %v717
        %v719 = vpop.f32.mrb[0].mxu0
        %v720 = vadd.f32 %v628, %v719
        %v721 = vpop.f32.mrb[0].mxu0
        %v722 = vadd.f32 %v630, %v721
        %v723 = vpop.f32.mrb[0].mxu0
        %v724 = vadd.f32 %v632, %v723
        %725 = vmatprep.mubr.bf16.mxu0 0
        %726 = vmatmul.mubr.bf16.gmra.mrb[0].mxu0 %v663
        %v727 = vpop.f32.mrb[0].mxu0
        %v728 = vadd.f32 %v636, %v727
        %v729 = vpop.f32.mrb[0].mxu0
        %v730 = vadd.f32 %v638, %v729
        %v731 = vpop.f32.mrb[0].mxu0
        %v732 = vadd.f32 %v640, %v731
        %v733 = vpop.f32.mrb[0].mxu0
        %v734 = vadd.f32 %v642, %v733
        %735 = vmatprep.mubr.bf16.mxu0 0
        %736 = vmatmul.mubr.bf16.gmra.mrb[0].mxu0 %v665
        %v737 = vpop.f32.mrb[0].mxu0
        %v738 = vadd.f32 %v646, %v737
        %v739 = vpop.f32.mrb[0].mxu0
        %v740 = vadd.f32 %v648, %v739
        %v741 = vpop.f32.mrb[0].mxu0
        %v742 = vadd.f32 %v650, %v741
        %v743 = vpop.f32.mrb[0].mxu0
        %v744 = vadd.f32 %v652, %v743
        %745 = vdwg.mxu0
        %s746 = scalar_lea.vmem [#allocation3], 16
        %v747 = vld [vmem:[%s746] sm:$0xff]
        %vm748 = vcmask 1046528
        %v749 = vrot.slane %v514, 1
        %v750 = vrot.slane %v515, 1
        %v751 = vsel %vm748, %v749, %v750
        %v752 = vrot.slane %v516, 1
        %v753 = vsel %vm748, %v750, %v752
        %v754 = vrot.slane %v517, 1
        %v755 = vsel %vm748, %v752, %v754
        %v756 = vrot.slane %v518, 1
        %v757 = vsel %vm748, %v754, %v756
        %v759 = vunpack.c.l.b16 %v747
        %v760 = vunpack.c.h.b16 %v747
        %v761 = vpack.c.b16 %v759, %v759
        %v762 = vpack.c.b16 %v760, %v760
        %v764 = vsel %vm561, %v751, 0
        %v767 = vsel %vm561, %v753, 0
        %v770 = vsel %vm561, %v755, 0
        %v773 = vsel %vm561, %v757, 0
        %v776 = vsel %vm574, %v761, 0
        %v779 = vsel %vm574, %v762, 0
        %781 = vmatprep.subr.bf16.mxu0 %v779
        %782 = vmatpush1.bf16.msra.mxu0 %v776
        %783 = vmatprep.subr.bf16.mxu0 0
        %784 = vmatpush1.bf16.msra.mxu0 0
        %785 = vmatprep.subr.bf16.mxu0 0
        %786 = vmatpush1.bf16.msra.mxu0 0
        %787 = vmatprep.subr.bf16.mxu0 0
        %788 = vmatpush1.bf16.msra.mxu0 0
        %789 = vmatprep.subr.bf16.mxu0 0
        %790 = vmatpush1.bf16.msra.mxu0 0
        %791 = vmatprep.subr.bf16.mxu0 0
        %792 = vmatpush1.bf16.msra.mxu0 0
        %793 = vmatprep.subr.bf16.mxu0 0
        %794 = vmatpush1.bf16.msra.mxu0 0
        %795 = vmatprep.subr.bf16.mxu0 0
        %796 = vmatpush1.bf16.msra.mxu0 0
        %797 = vmatprep.subr.bf16.mxu0 0
        %798 = vmatpush1.bf16.msra.mxu0 0
        %799 = vmatprep.subr.bf16.mxu0 0
        %800 = vmatpush1.bf16.msra.mxu0 0
        %801 = vmatprep.subr.bf16.mxu0 0
        %802 = vmatpush1.bf16.msra.mxu0 0
        %803 = vmatprep.subr.bf16.mxu0 0
        %804 = vmatpush1.bf16.msra.mxu0 0
        %805 = vmatprep.subr.bf16.mxu0 0
        %806 = vmatpush1.bf16.msra.mxu0 0
        %807 = vmatprep.subr.bf16.mxu0 0
        %808 = vmatpush1.bf16.msra.mxu0 0
        %809 = vmatprep.subr.bf16.mxu0 0
        %810 = vmatpush1.bf16.msra.mxu0 0
        %811 = vmatprep.subr.bf16.mxu0 0
        %812 = vmatpush1.bf16.msra.mxu0 0
        %813 = vmatprep.mubr.bf16.mxu0 0
        %814 = vmatmul.mubr.bf16.gmra.mrb[0].mxu0 %v764
        %v815 = vpop.f32.mrb[0].mxu0
        %v816 = vadd.f32 0.0, %v815
        %v817 = vpop.f32.mrb[0].mxu0
        %v818 = vadd.f32 0.0, %v817
        %v819 = vpop.f32.mrb[0].mxu0
        %v820 = vadd.f32 0.0, %v819
        %v821 = vpop.f32.mrb[0].mxu0
        %v822 = vadd.f32 0.0, %v821
        %823 = vmatprep.mubr.bf16.mxu0 0
        %824 = vmatmul.mubr.bf16.gmra.mrb[0].mxu0 %v767
        %v825 = vpop.f32.mrb[0].mxu0
        %v826 = vadd.f32 0.0, %v825
        %v827 = vpop.f32.mrb[0].mxu0
        %v828 = vadd.f32 0.0, %v827
        %v829 = vpop.f32.mrb[0].mxu0
        %v830 = vadd.f32 0.0, %v829
        %v831 = vpop.f32.mrb[0].mxu0
        %v832 = vadd.f32 0.0, %v831
        %833 = vmatprep.mubr.bf16.mxu0 0
        %834 = vmatmul.mubr.bf16.gmra.mrb[0].mxu0 %v770
        %v835 = vpop.f32.mrb[0].mxu0
        %v836 = vadd.f32 0.0, %v835
        %v837 = vpop.f32.mrb[0].mxu0
        %v838 = vadd.f32 0.0, %v837
        %v839 = vpop.f32.mrb[0].mxu0
        %v840 = vadd.f32 0.0, %v839
        %v841 = vpop.f32.mrb[0].mxu0
        %v842 = vadd.f32 0.0, %v841
        %843 = vmatprep.mubr.bf16.mxu0 0
        %844 = vmatmul.mubr.bf16.gmra.mrb[0].mxu0 %v773
        %v845 = vpop.f32.mrb[0].mxu0
        %v846 = vadd.f32 0.0, %v845
        %v847 = vpop.f32.mrb[0].mxu0
        %v848 = vadd.f32 0.0, %v847
        %v849 = vpop.f32.mrb[0].mxu0
        %v850 = vadd.f32 0.0, %v849
        %v851 = vpop.f32.mrb[0].mxu0
        %v852 = vadd.f32 0.0, %v851
        %853 = vdwg.mxu0
        %v854 = vadd.f32 %v708, %v816
        %v855 = vadd.f32 %v710, %v818
        %v856 = vadd.f32 %v712, %v820
        %v857 = vadd.f32 %v714, %v822
        %v858 = vadd.f32 %v718, %v826
        %v859 = vadd.f32 %v720, %v828
        %v860 = vadd.f32 %v722, %v830
        %v861 = vadd.f32 %v724, %v832
        %v862 = vadd.f32 %v728, %v836
        %v863 = vadd.f32 %v730, %v838
        %v864 = vadd.f32 %v732, %v840
        %v865 = vadd.f32 %v734, %v842
        %v866 = vadd.f32 %v738, %v846
        %v867 = vadd.f32 %v740, %v848
        %v868 = vadd.f32 %v742, %v850
        %v869 = vadd.f32 %v744, %v852
        %s870 = scalar_lea.vmem [#allocation3], 24
        %v871 = vld [vmem:[%s870] sm:$0xff]
        %vm872 = vsmask.f32 6400
        %v873 = vrot.slane %v521, 1
        %v874 = vrot.slane %v523, 2
        %v875 = vor.u32 %v873, %v874
        %v876 = vrot.slane %v532, 1
        %v877 = vrot.slane %v528, 2
        %v878 = vor.u32 %v876, %v877
        %v879 = vsel %vm872, %v875, %v878
        %v880 = vrot.slane %v540, 1
        %v881 = vrot.slane %v536, 2
        %v882 = vor.u32 %v880, %v881
        %v883 = vsel %vm872, %v878, %v882
        %v884 = vrot.slane %v548, 1
        %v885 = vrot.slane %v544, 2
        %v886 = vor.u32 %v884, %v885
        %v887 = vsel %vm872, %v882, %v886
        %v888 = vshrl.u32 %v518, 16
        %v890 = vrot.slane %v888, 1
        %v891 = vrot.slane %v552, 2
        %v892 = vor.u32 %v890, %v891
        %v893 = vsel %vm872, %v886, %v892
        %v895 = vunpack.c.l.b16 %v871
        %v896 = vunpack.c.h.b16 %v871
        %v897 = vpack.c.b16 %v895, %v895
        %v898 = vpack.c.b16 %v896, %v896
        %v900 = vsel %vm561, %v879, 0
        %v903 = vsel %vm561, %v883, 0
        %v906 = vsel %vm561, %v887, 0
        %v909 = vsel %vm561, %v893, 0
        %v912 = vsel %vm574, %v897, 0
        %v915 = vsel %vm574, %v898, 0
        %917 = vmatprep.subr.bf16.mxu0 %v915
        %918 = vmatpush1.bf16.msra.mxu0 %v912
        %919 = vmatprep.subr.bf16.mxu0 0
        %920 = vmatpush1.bf16.msra.mxu0 0
        %921 = vmatprep.subr.bf16.mxu0 0
        %922 = vmatpush1.bf16.msra.mxu0 0
        %923 = vmatprep.subr.bf16.mxu0 0
        %924 = vmatpush1.bf16.msra.mxu0 0
        %925 = vmatprep.subr.bf16.mxu0 0
        %926 = vmatpush1.bf16.msra.mxu0 0
        %927 = vmatprep.subr.bf16.mxu0 0
        %928 = vmatpush1.bf16.msra.mxu0 0
        %929 = vmatprep.subr.bf16.mxu0 0
        %930 = vmatpush1.bf16.msra.mxu0 0
        %931 = vmatprep.subr.bf16.mxu0 0
        %932 = vmatpush1.bf16.msra.mxu0 0
        %933 = vmatprep.subr.bf16.mxu0 0
        %934 = vmatpush1.bf16.msra.mxu0 0
        %935 = vmatprep.subr.bf16.mxu0 0
        %936 = vmatpush1.bf16.msra.mxu0 0
        %937 = vmatprep.subr.bf16.mxu0 0
        %938 = vmatpush1.bf16.msra.mxu0 0
        %939 = vmatprep.subr.bf16.mxu0 0
        %940 = vmatpush1.bf16.msra.mxu0 0
        %941 = vmatprep.subr.bf16.mxu0 0
        %942 = vmatpush1.bf16.msra.mxu0 0
        %943 = vmatprep.subr.bf16.mxu0 0
        %944 = vmatpush1.bf16.msra.mxu0 0
        %945 = vmatprep.subr.bf16.mxu0 0
        %946 = vmatpush1.bf16.msra.mxu0 0
        %947 = vmatprep.subr.bf16.mxu0 0
        %948 = vmatpush1.bf16.msra.mxu0 0
        %949 = vmatprep.mubr.bf16.mxu0 0
        %950 = vmatmul.mubr.bf16.gmra.mrb[0].mxu0 %v900
        %v951 = vpop.f32.mrb[0].mxu0
        %v952 = vadd.f32 0.0, %v951
        %v953 = vpop.f32.mrb[0].mxu0
        %v954 = vadd.f32 0.0, %v953
        %v955 = vpop.f32.mrb[0].mxu0
        %v956 = vadd.f32 0.0, %v955
        %v957 = vpop.f32.mrb[0].mxu0
        %v958 = vadd.f32 0.0, %v957
        %959 = vmatprep.mubr.bf16.mxu0 0
        %960 = vmatmul.mubr.bf16.gmra.mrb[0].mxu0 %v903
        %v961 = vpop.f32.mrb[0].mxu0
        %v962 = vadd.f32 0.0, %v961
        %v963 = vpop.f32.mrb[0].mxu0
        %v964 = vadd.f32 0.0, %v963
        %v965 = vpop.f32.mrb[0].mxu0
        %v966 = vadd.f32 0.0, %v965
        %v967 = vpop.f32.mrb[0].mxu0
        %v968 = vadd.f32 0.0, %v967
        %969 = vmatprep.mubr.bf16.mxu0 0
        %970 = vmatmul.mubr.bf16.gmra.mrb[0].mxu0 %v906
        %v971 = vpop.f32.mrb[0].mxu0
        %v972 = vadd.f32 0.0, %v971
        %v973 = vpop.f32.mrb[0].mxu0
        %v974 = vadd.f32 0.0, %v973
        %v975 = vpop.f32.mrb[0].mxu0
        %v976 = vadd.f32 0.0, %v975
        %v977 = vpop.f32.mrb[0].mxu0
        %v978 = vadd.f32 0.0, %v977
        %979 = vmatprep.mubr.bf16.mxu0 0
        %980 = vmatmul.mubr.bf16.gmra.mrb[0].mxu0 %v909
        %v981 = vpop.f32.mrb[0].mxu0
        %v982 = vadd.f32 0.0, %v981
        %v983 = vpop.f32.mrb[0].mxu0
        %v984 = vadd.f32 0.0, %v983
        %v985 = vpop.f32.mrb[0].mxu0
        %v986 = vadd.f32 0.0, %v985
        %v987 = vpop.f32.mrb[0].mxu0
        %v988 = vadd.f32 0.0, %v987
        %989 = vdwg.mxu0
        %v990 = vadd.f32 %v854, %v952
        %v991 = vadd.f32 %v855, %v954
        %v992 = vadd.f32 %v856, %v956
        %v993 = vadd.f32 %v857, %v958
        %v994 = vadd.f32 %v858, %v962
        %v995 = vadd.f32 %v859, %v964
        %v996 = vadd.f32 %v860, %v966
        %v997 = vadd.f32 %v861, %v968
        %v998 = vadd.f32 %v862, %v972
        %v999 = vadd.f32 %v863, %v974
        %v1000 = vadd.f32 %v864, %v976
        %v1001 = vadd.f32 %v865, %v978
        %v1002 = vadd.f32 %v866, %v982
        %v1003 = vadd.f32 %v867, %v984
        %v1004 = vadd.f32 %v868, %v986
        %v1005 = vadd.f32 %v869, %v988
        %s1006 = scalar_lea.vmem [#allocation3], 32
        %v1007 = vld [vmem:[%s1006] sm:$0xff]
        %vm1008 = vcmask 1045504
        %v1009 = vrot.slane %v514, 2
        %v1010 = vrot.slane %v515, 2
        %v1011 = vsel %vm1008, %v1009, %v1010
        %v1012 = vrot.slane %v516, 2
        %v1013 = vsel %vm1008, %v1010, %v1012
        %v1014 = vrot.slane %v517, 2
        %v1015 = vsel %vm1008, %v1012, %v1014
        %v1016 = vrot.slane %v518, 2
        %v1017 = vsel %vm1008, %v1014, %v1016
        %v1019 = vunpack.c.l.b16 %v1007
        %v1020 = vunpack.c.h.b16 %v1007
        %v1021 = vpack.c.b16 %v1019, %v1019
        %v1022 = vpack.c.b16 %v1020, %v1020
        %v1024 = vsel %vm561, %v1011, 0
        %v1027 = vsel %vm561, %v1013, 0
        %v1030 = vsel %vm561, %v1015, 0
        %v1033 = vsel %vm561, %v1017, 0
        %v1036 = vsel %vm574, %v1021, 0
        %v1039 = vsel %vm574, %v1022, 0
        %1041 = vmatprep.subr.bf16.mxu0 %v1039
        %1042 = vmatpush1.bf16.msra.mxu0 %v1036
        %1043 = vmatprep.subr.bf16.mxu0 0
        %1044 = vmatpush1.bf16.msra.mxu0 0
        %1045 = vmatprep.subr.bf16.mxu0 0
        %1046 = vmatpush1.bf16.msra.mxu0 0
        %1047 = vmatprep.subr.bf16.mxu0 0
        %1048 = vmatpush1.bf16.msra.mxu0 0
        %1049 = vmatprep.subr.bf16.mxu0 0
        %1050 = vmatpush1.bf16.msra.mxu0 0
        %1051 = vmatprep.subr.bf16.mxu0 0
        %1052 = vmatpush1.bf16.msra.mxu0 0
        %1053 = vmatprep.subr.bf16.mxu0 0
        %1054 = vmatpush1.bf16.msra.mxu0 0
        %1055 = vmatprep.subr.bf16.mxu0 0
        %1056 = vmatpush1.bf16.msra.mxu0 0
        %1057 = vmatprep.subr.bf16.mxu0 0
        %1058 = vmatpush1.bf16.msra.mxu0 0
        %1059 = vmatprep.subr.bf16.mxu0 0
        %1060 = vmatpush1.bf16.msra.mxu0 0
        %1061 = vmatprep.subr.bf16.mxu0 0
        %1062 = vmatpush1.bf16.msra.mxu0 0
        %1063 = vmatprep.subr.bf16.mxu0 0
        %1064 = vmatpush1.bf16.msra.mxu0 0
        %1065 = vmatprep.subr.bf16.mxu0 0
        %1066 = vmatpush1.bf16.msra.mxu0 0
        %1067 = vmatprep.subr.bf16.mxu0 0
        %1068 = vmatpush1.bf16.msra.mxu0 0
        %1069 = vmatprep.subr.bf16.mxu0 0
        %1070 = vmatpush1.bf16.msra.mxu0 0
        %1071 = vmatprep.subr.bf16.mxu0 0
        %1072 = vmatpush1.bf16.msra.mxu0 0
        %1073 = vmatprep.mubr.bf16.mxu0 0
        %1074 = vmatmul.mubr.bf16.gmra.mrb[0].mxu0 %v1024
        %v1075 = vpop.f32.mrb[0].mxu0
        %v1076 = vadd.f32 0.0, %v1075
        %v1077 = vpop.f32.mrb[0].mxu0
        %v1078 = vadd.f32 0.0, %v1077
        %v1079 = vpop.f32.mrb[0].mxu0
        %v1080 = vadd.f32 0.0, %v1079
        %v1081 = vpop.f32.mrb[0].mxu0
        %v1082 = vadd.f32 0.0, %v1081
        %1083 = vmatprep.mubr.bf16.mxu0 0
        %1084 = vmatmul.mubr.bf16.gmra.mrb[0].mxu0 %v1027
        %v1085 = vpop.f32.mrb[0].mxu0
        %v1086 = vadd.f32 0.0, %v1085
        %v1087 = vpop.f32.mrb[0].mxu0
        %v1088 = vadd.f32 0.0, %v1087
        %v1089 = vpop.f32.mrb[0].mxu0
        %v1090 = vadd.f32 0.0, %v1089
        %v1091 = vpop.f32.mrb[0].mxu0
        %v1092 = vadd.f32 0.0, %v1091
        %1093 = vmatprep.mubr.bf16.mxu0 0
        %1094 = vmatmul.mubr.bf16.gmra.mrb[0].mxu0 %v1030
        %v1095 = vpop.f32.mrb[0].mxu0
        %v1096 = vadd.f32 0.0, %v1095
        %v1097 = vpop.f32.mrb[0].mxu0
        %v1098 = vadd.f32 0.0, %v1097
        %v1099 = vpop.f32.mrb[0].mxu0
        %v1100 = vadd.f32 0.0, %v1099
        %v1101 = vpop.f32.mrb[0].mxu0
        %v1102 = vadd.f32 0.0, %v1101
        %1103 = vmatprep.mubr.bf16.mxu0 0
        %1104 = vmatmul.mubr.bf16.gmra.mrb[0].mxu0 %v1033
        %v1105 = vpop.f32.mrb[0].mxu0
        %v1106 = vadd.f32 0.0, %v1105
        %v1107 = vpop.f32.mrb[0].mxu0
        %v1108 = vadd.f32 0.0, %v1107
        %v1109 = vpop.f32.mrb[0].mxu0
        %v1110 = vadd.f32 0.0, %v1109
        %v1111 = vpop.f32.mrb[0].mxu0
        %v1112 = vadd.f32 0.0, %v1111
        %1113 = vdwg.mxu0
        %v1114 = vadd.f32 %v990, %v1076
        %v1115 = vadd.f32 %v991, %v1078
        %v1116 = vadd.f32 %v992, %v1080
        %v1117 = vadd.f32 %v993, %v1082
        %v1118 = vadd.f32 %v994, %v1086
        %v1119 = vadd.f32 %v995, %v1088
        %v1120 = vadd.f32 %v996, %v1090
        %v1121 = vadd.f32 %v997, %v1092
        %v1122 = vadd.f32 %v998, %v1096
        %v1123 = vadd.f32 %v999, %v1098
        %v1124 = vadd.f32 %v1000, %v1100
        %v1125 = vadd.f32 %v1001, %v1102
        %v1126 = vadd.f32 %v1002, %v1106
        %v1127 = vadd.f32 %v1003, %v1108
        %v1128 = vadd.f32 %v1004, %v1110
        %v1129 = vadd.f32 %v1005, %v1112
        %v1130 = vld [vmem:[%s2] sm:$0x3]
        %v1132 = vlaneseq
        %v1133 = vshrl.u32 %v1132, 7
        %v1134 = vsub.s32 0, %v1133
        %v1135 = vrot.slane %v1130, %v1134
        %v1136 = vlaneseq
        %v1137 = vshrl.u32 %v1136, 7
        %v1138 = vsub.s32 1, %v1137
        %v1139 = vrot.slane %v1130, %v1138
        %v1142 = vadd.f32 %v1114, %v1135
        %v1143 = vadd.f32 %v1115, %v1139
        %v1144 = vadd.f32 %v1116, %v1135
        %v1145 = vadd.f32 %v1117, %v1139
        %v1146 = vadd.f32 %v1118, %v1135
        %v1147 = vadd.f32 %v1119, %v1139
        %v1148 = vadd.f32 %v1120, %v1135
        %v1149 = vadd.f32 %v1121, %v1139
        %v1150 = vadd.f32 %v1122, %v1135
        %v1151 = vadd.f32 %v1123, %v1139
        %v1152 = vadd.f32 %v1124, %v1135
        %v1153 = vadd.f32 %v1125, %v1139
        %v1154 = vadd.f32 %v1126, %v1135
        %v1155 = vadd.f32 %v1127, %v1139
        %v1156 = vadd.f32 %v1128, %v1135
        %v1157 = vadd.f32 %v1129, %v1139
        %v1158 = vlaneseq
        %v1159 = vshrl.u32 %v1158, 7
        %v1160 = vadd.s32 %v1159, 8
        %v1161 = vadd.s32 %v1159, 16
        %v1162 = vadd.s32 %v1159, 24
        %v1163 = vadd.s32 %v1159, 32
        %v1164 = vadd.s32 %v1159, 40
        %v1165 = vadd.s32 %v1159, 48
        %v1166 = vadd.s32 %v1159, 56
        %s1167 = smul.u32 %s28, 64
        %v1168 = vstv %s1167
        %v1169 = vadd.s32 %v1159, %v1168
        %v1170 = vadd.s32 %v1160, %v1168
        %v1171 = vadd.s32 %v1161, %v1168
        %v1172 = vadd.s32 %v1162, %v1168
        %v1173 = vadd.s32 %v1163, %v1168
        %v1174 = vadd.s32 %v1164, %v1168
        %v1175 = vadd.s32 %v1165, %v1168
        %v1176 = vadd.s32 %v1166, %v1168
        %vm1177 = vcmp.eq.s32.totalorder %v1169, 0
        %vm1178 = vcmp.eq.s32.totalorder %v1170, 0
        %vm1179 = vcmp.eq.s32.totalorder %v1171, 0
        %vm1180 = vcmp.eq.s32.totalorder %v1172, 0
        %vm1181 = vcmp.eq.s32.totalorder %v1173, 0
        %vm1182 = vcmp.eq.s32.totalorder %v1174, 0
        %vm1183 = vcmp.eq.s32.totalorder %v1175, 0
        %vm1184 = vcmp.eq.s32.totalorder %v1176, 0
        %v1185 = vsel %vm1177, 1.0, 0.0
        %v1186 = vsel %vm1178, 1.0, 0.0
        %v1187 = vsel %vm1179, 1.0, 0.0
        %v1188 = vsel %vm1180, 1.0, 0.0
        %v1189 = vsel %vm1181, 1.0, 0.0
        %v1190 = vsel %vm1182, 1.0, 0.0
        %v1191 = vsel %vm1183, 1.0, 0.0
        %v1192 = vsel %vm1184, 1.0, 0.0
        %v1193 = vld [vmem:[%s3] sm:$0x3]
        %v1195 = vlaneseq
        %v1196 = vshrl.u32 %v1195, 7
        %v1197 = vsub.s32 0, %v1196
        %v1198 = vrot.slane %v1193, %v1197
        %v1199 = vlaneseq
        %v1200 = vshrl.u32 %v1199, 7
        %v1201 = vsub.s32 1, %v1200
        %v1202 = vrot.slane %v1193, %v1201
        %v1205 = vmul.f32 %v1185, %v1198
        %v1206 = vmul.f32 %v1185, %v1202
        %v1207 = vmul.f32 %v1186, %v1198
        %v1208 = vmul.f32 %v1186, %v1202
        %v1209 = vmul.f32 %v1187, %v1198
        %v1210 = vmul.f32 %v1187, %v1202
        %v1211 = vmul.f32 %v1188, %v1198
        %v1212 = vmul.f32 %v1188, %v1202
        %v1213 = vmul.f32 %v1189, %v1198
        %v1214 = vmul.f32 %v1189, %v1202
        %v1215 = vmul.f32 %v1190, %v1198
        %v1216 = vmul.f32 %v1190, %v1202
        %v1217 = vmul.f32 %v1191, %v1198
        %v1218 = vmul.f32 %v1191, %v1202
        %v1219 = vmul.f32 %v1192, %v1198
        %v1220 = vmul.f32 %v1192, %v1202
        %v1221 = vsub.f32 %v1142, %v1205
        %v1222 = vsub.f32 %v1143, %v1206
        %v1223 = vsub.f32 %v1144, %v1207
        %v1224 = vsub.f32 %v1145, %v1208
        %v1225 = vsub.f32 %v1146, %v1209
        %v1226 = vsub.f32 %v1147, %v1210
        %v1227 = vsub.f32 %v1148, %v1211
        %v1228 = vsub.f32 %v1149, %v1212
        %v1229 = vsub.f32 %v1150, %v1213
        %v1230 = vsub.f32 %v1151, %v1214
        %v1231 = vsub.f32 %v1152, %v1215
        %v1232 = vsub.f32 %v1153, %v1216
        %v1233 = vsub.f32 %v1154, %v1217
        %v1234 = vsub.f32 %v1155, %v1218
        %v1235 = vsub.f32 %v1156, %v1219
        %v1236 = vsub.f32 %v1157, %v1220
        %vm1237 = vcmp.eq.s32.totalorder %v1169, 159
        %vm1238 = vcmp.eq.s32.totalorder %v1170, 159
        %vm1239 = vcmp.eq.s32.totalorder %v1171, 159
        %vm1240 = vcmp.eq.s32.totalorder %v1172, 159
        %vm1241 = vcmp.eq.s32.totalorder %v1173, 159
        %vm1242 = vcmp.eq.s32.totalorder %v1174, 159
        %vm1243 = vcmp.eq.s32.totalorder %v1175, 159
        %vm1244 = vcmp.eq.s32.totalorder %v1176, 159
        %v1245 = vsel %vm1237, 1.0, 0.0
        %v1246 = vsel %vm1238, 1.0, 0.0
        %v1247 = vsel %vm1239, 1.0, 0.0
        %v1248 = vsel %vm1240, 1.0, 0.0
        %v1249 = vsel %vm1241, 1.0, 0.0
        %v1250 = vsel %vm1242, 1.0, 0.0
        %v1251 = vsel %vm1243, 1.0, 0.0
        %v1252 = vsel %vm1244, 1.0, 0.0
        %v1253 = vld [vmem:[%s4] sm:$0x3]
        %v1255 = vlaneseq
        %v1256 = vshrl.u32 %v1255, 7
        %v1257 = vsub.s32 0, %v1256
        %v1258 = vrot.slane %v1253, %v1257
        %v1259 = vlaneseq
        %v1260 = vshrl.u32 %v1259, 7
        %v1261 = vsub.s32 1, %v1260
        %v1262 = vrot.slane %v1253, %v1261
        %v1265 = vmul.f32 %v1245, %v1258
        %v1266 = vmul.f32 %v1245, %v1262
        %v1267 = vmul.f32 %v1246, %v1258
        %v1268 = vmul.f32 %v1246, %v1262
        %v1269 = vmul.f32 %v1247, %v1258
        %v1270 = vmul.f32 %v1247, %v1262
        %v1271 = vmul.f32 %v1248, %v1258
        %v1272 = vmul.f32 %v1248, %v1262
        %v1273 = vmul.f32 %v1249, %v1258
        %v1274 = vmul.f32 %v1249, %v1262
        %v1275 = vmul.f32 %v1250, %v1258
        %v1276 = vmul.f32 %v1250, %v1262
        %v1277 = vmul.f32 %v1251, %v1258
        %v1278 = vmul.f32 %v1251, %v1262
        %v1279 = vmul.f32 %v1252, %v1258
        %v1280 = vmul.f32 %v1252, %v1262
        %v1281 = vsub.f32 %v1221, %v1265
        %v1282 = vsub.f32 %v1222, %v1266
        %v1283 = vsub.f32 %v1223, %v1267
        %v1284 = vsub.f32 %v1224, %v1268
        %v1285 = vsub.f32 %v1225, %v1269
        %v1286 = vsub.f32 %v1226, %v1270
        %v1287 = vsub.f32 %v1227, %v1271
        %v1288 = vsub.f32 %v1228, %v1272
        %v1289 = vsub.f32 %v1229, %v1273
        %v1290 = vsub.f32 %v1230, %v1274
        %v1291 = vsub.f32 %v1231, %v1275
        %v1292 = vsub.f32 %v1232, %v1276
        %v1293 = vsub.f32 %v1233, %v1277
        %v1294 = vsub.f32 %v1234, %v1278
        %v1295 = vsub.f32 %v1235, %v1279
        %v1296 = vsub.f32 %v1236, %v1280
        %v1297 = vmax.f32 %v1281, 0.0
        %v1298 = vmax.f32 %v1282, 0.0
        %v1299 = vmax.f32 %v1283, 0.0
        %v1300 = vmax.f32 %v1284, 0.0
        %v1301 = vmax.f32 %v1285, 0.0
        %v1302 = vmax.f32 %v1286, 0.0
        %v1303 = vmax.f32 %v1287, 0.0
        %v1304 = vmax.f32 %v1288, 0.0
        %v1305 = vmax.f32 %v1289, 0.0
        %v1306 = vmax.f32 %v1290, 0.0
        %v1307 = vmax.f32 %v1291, 0.0
        %v1308 = vmax.f32 %v1292, 0.0
        %v1309 = vmax.f32 %v1293, 0.0
        %v1310 = vmax.f32 %v1294, 0.0
        %v1311 = vmax.f32 %v1295, 0.0
        %v1312 = vmax.f32 %v1296, 0.0
        %v1313 = vpack.c.bf16 %v1299, %v1297
        %v1314 = vpack.c.bf16 %v1300, %v1298
        %v1315 = vpack.c.bf16 %v1303, %v1301
        %v1316 = vpack.c.bf16 %v1304, %v1302
        %v1317 = vpack.c.bf16 %v1307, %v1305
        %v1318 = vpack.c.bf16 %v1308, %v1306
        %v1319 = vpack.c.bf16 %v1311, %v1309
        %v1320 = vpack.c.bf16 %v1312, %v1310
        %v1321 = vld [vmem:[%s5] sm:$0xf]
        %v1322 = vld [vmem:[%s5 + $0x4] sm:$0xf]
        %v1323 = vld [vmem:[%s5 + $0x8] sm:$0xf]
        %v1324 = vld [vmem:[%s5 + $0xc] sm:$0xf]
        %v1325 = vld [vmem:[%s5 + $0x10] sm:$0xf]
        %v1326 = vld [vmem:[%s5 + $0x14] sm:$0xf]
        %v1327 = vld [vmem:[%s5 + $0x18] sm:$0xf]
        %v1328 = vld [vmem:[%s5 + $0x1c] sm:$0xf]
        %v1329 = vld [vmem:[%s5 + $0x20] sm:$0xf]
        %v1330 = vld [vmem:[%s5 + $0x24] sm:$0xf]
        %v1331 = vld [vmem:[%s5 + $0x28] sm:$0xf]
        %v1332 = vld [vmem:[%s5 + $0x2c] sm:$0xf]
        %v1333 = vld [vmem:[%s5 + $0x30] sm:$0xf]
        %v1334 = vld [vmem:[%s5 + $0x34] sm:$0xf]
        %v1335 = vld [vmem:[%s5 + $0x38] sm:$0xf]
        %v1336 = vld [vmem:[%s5 + $0x3c] sm:$0xf]
        %v1337 = vld [vmem:[%s5 + $0x40] sm:$0xf]
        %v1338 = vld [vmem:[%s5 + $0x44] sm:$0xf]
        %v1339 = vld [vmem:[%s5 + $0x48] sm:$0xf]
        %v1340 = vld [vmem:[%s5 + $0x4c] sm:$0xf]
        %v1341 = vld [vmem:[%s5 + $0x50] sm:$0xf]
        %v1342 = vld [vmem:[%s5 + $0x54] sm:$0xf]
        %v1343 = vld [vmem:[%s5 + $0x58] sm:$0xf]
        %v1344 = vld [vmem:[%s5 + $0x5c] sm:$0xf]
        %v1345 = vld [vmem:[%s5 + $0x60] sm:$0xf]
        %v1346 = vld [vmem:[%s5 + $0x64] sm:$0xf]
        %v1347 = vld [vmem:[%s5 + $0x68] sm:$0xf]
        %v1348 = vld [vmem:[%s5 + $0x6c] sm:$0xf]
        %v1349 = vld [vmem:[%s5 + $0x70] sm:$0xf]
        %v1350 = vld [vmem:[%s5 + $0x74] sm:$0xf]
        %v1351 = vld [vmem:[%s5 + $0x78] sm:$0xf]
        %v1352 = vld [vmem:[%s5 + $0x7c] sm:$0xf]
        %v1353 = vld [vmem:[%s6] sm:$0x1]
        %v1355 = vlaneseq
        %v1356 = vshrl.u32 %v1355, 7
        %v1357 = vsub.s32 0, %v1356
        %v1358 = vrot.slane %v1353, %v1357
        %v1392 = vunpack.c.l.b16 %v1321
        %v1393 = vunpack.c.l.b16 %v1322
        %v1394 = vunpack.c.l.b16 %v1323
        %v1395 = vunpack.c.l.b16 %v1324
        %v1396 = vunpack.c.l.b16 %v1325
        %v1397 = vunpack.c.l.b16 %v1326
        %v1398 = vunpack.c.l.b16 %v1327
        %v1399 = vunpack.c.l.b16 %v1328
        %v1400 = vunpack.c.l.b16 %v1329
        %v1401 = vunpack.c.l.b16 %v1330
        %v1402 = vunpack.c.l.b16 %v1331
        %v1403 = vunpack.c.l.b16 %v1332
        %v1404 = vunpack.c.l.b16 %v1333
        %v1405 = vunpack.c.l.b16 %v1334
        %v1406 = vunpack.c.l.b16 %v1335
        %v1407 = vunpack.c.l.b16 %v1336
        %v1408 = vunpack.c.l.b16 %v1337
        %v1409 = vunpack.c.l.b16 %v1338
        %v1410 = vunpack.c.l.b16 %v1339
        %v1411 = vunpack.c.l.b16 %v1340
        %v1412 = vunpack.c.l.b16 %v1341
        %v1413 = vunpack.c.l.b16 %v1342
        %v1414 = vunpack.c.l.b16 %v1343
        %v1415 = vunpack.c.l.b16 %v1344
        %v1416 = vunpack.c.l.b16 %v1345
        %v1417 = vunpack.c.l.b16 %v1346
        %v1418 = vunpack.c.l.b16 %v1347
        %v1419 = vunpack.c.l.b16 %v1348
        %v1420 = vunpack.c.l.b16 %v1349
        %v1421 = vunpack.c.l.b16 %v1350
        %v1422 = vunpack.c.l.b16 %v1351
        %v1423 = vunpack.c.l.b16 %v1352
        %v1424 = vpack.c.b16 %v1393, %v1392
        %v1425 = vpack.c.b16 %v1395, %v1394
        %v1426 = vpack.c.b16 %v1397, %v1396
        %v1427 = vpack.c.b16 %v1399, %v1398
        %v1428 = vpack.c.b16 %v1401, %v1400
        %v1429 = vpack.c.b16 %v1403, %v1402
        %v1430 = vpack.c.b16 %v1405, %v1404
        %v1431 = vpack.c.b16 %v1407, %v1406
        %v1432 = vpack.c.b16 %v1409, %v1408
        %v1433 = vpack.c.b16 %v1411, %v1410
        %v1434 = vpack.c.b16 %v1413, %v1412
        %v1435 = vpack.c.b16 %v1415, %v1414
        %v1436 = vpack.c.b16 %v1417, %v1416
        %v1437 = vpack.c.b16 %v1419, %v1418
        %v1438 = vpack.c.b16 %v1421, %v1420
        %v1439 = vpack.c.b16 %v1423, %v1422
        %1456 = vmatprep.subr.bf16.mxu0 0
        %1457 = vmatpush1.bf16.msra.mxu0 %v1424
        %1458 = vmatprep.subr.bf16.mxu0 0
        %1459 = vmatpush1.bf16.msra.mxu0 %v1425
        %1460 = vmatprep.subr.bf16.mxu0 0
        %1461 = vmatpush1.bf16.msra.mxu0 %v1426
        %1462 = vmatprep.subr.bf16.mxu0 0
        %1463 = vmatpush1.bf16.msra.mxu0 %v1427
        %1464 = vmatprep.subr.bf16.mxu0 0
        %1465 = vmatpush1.bf16.msra.mxu0 %v1428
        %1466 = vmatprep.subr.bf16.mxu0 0
        %1467 = vmatpush1.bf16.msra.mxu0 %v1429
        %1468 = vmatprep.subr.bf16.mxu0 0
        %1469 = vmatpush1.bf16.msra.mxu0 %v1430
        %1470 = vmatprep.subr.bf16.mxu0 0
        %1471 = vmatpush1.bf16.msra.mxu0 %v1431
        %1472 = vmatprep.subr.bf16.mxu0 0
        %1473 = vmatpush1.bf16.msra.mxu0 %v1432
        %1474 = vmatprep.subr.bf16.mxu0 0
        %1475 = vmatpush1.bf16.msra.mxu0 %v1433
        %1476 = vmatprep.subr.bf16.mxu0 0
        %1477 = vmatpush1.bf16.msra.mxu0 %v1434
        %1478 = vmatprep.subr.bf16.mxu0 0
        %1479 = vmatpush1.bf16.msra.mxu0 %v1435
        %1480 = vmatprep.subr.bf16.mxu0 0
        %1481 = vmatpush1.bf16.msra.mxu0 %v1436
        %1482 = vmatprep.subr.bf16.mxu0 0
        %1483 = vmatpush1.bf16.msra.mxu0 %v1437
        %1484 = vmatprep.subr.bf16.mxu0 0
        %1485 = vmatpush1.bf16.msra.mxu0 %v1438
        %1486 = vmatprep.subr.bf16.mxu0 0
        %1487 = vmatpush1.bf16.msra.mxu0 %v1439
        %1488 = vmatprep.mubr.bf16.mxu0 %v1314
        %1489 = vmatmul.mubr.bf16.gmra.mrb[0].mxu0 %v1313
        %v1490 = vpop.f32.mrb[0].mxu0
        %v1491 = vadd.f32 %v1358, %v1490
        %v1492 = vpop.f32.mrb[0].mxu0
        %v1493 = vpop.f32.mrb[0].mxu0
        %v1494 = vadd.f32 %v1358, %v1493
        %v1495 = vpop.f32.mrb[0].mxu0
        %1496 = vmatprep.mubr.bf16.mxu0 %v1316
        %1497 = vmatmul.mubr.bf16.gmra.mrb[0].mxu0 %v1315
        %v1498 = vpop.f32.mrb[0].mxu0
        %v1499 = vadd.f32 %v1358, %v1498
        %v1500 = vpop.f32.mrb[0].mxu0
        %v1501 = vpop.f32.mrb[0].mxu0
        %v1502 = vadd.f32 %v1358, %v1501
        %v1503 = vpop.f32.mrb[0].mxu0
        %1504 = vmatprep.mubr.bf16.mxu0 %v1318
        %1505 = vmatmul.mubr.bf16.gmra.mrb[0].mxu0 %v1317
        %v1506 = vpop.f32.mrb[0].mxu0
        %v1507 = vadd.f32 %v1358, %v1506
        %v1508 = vpop.f32.mrb[0].mxu0
        %v1509 = vpop.f32.mrb[0].mxu0
        %v1510 = vadd.f32 %v1358, %v1509
        %v1511 = vpop.f32.mrb[0].mxu0
        %1512 = vmatprep.mubr.bf16.mxu0 %v1320
        %1513 = vmatmul.mubr.bf16.gmra.mrb[0].mxu0 %v1319
        %v1514 = vpop.f32.mrb[0].mxu0
        %v1515 = vadd.f32 %v1358, %v1514
        %v1516 = vpop.f32.mrb[0].mxu0
        %v1517 = vpop.f32.mrb[0].mxu0
        %v1518 = vadd.f32 %v1358, %v1517
        %v1519 = vpop.f32.mrb[0].mxu0
        %1520 = vdwg.mxu0
        %v1521 = vmax.f32 %v1491, 0.0
        %v1522 = vmax.f32 %v1494, 0.0
        %v1523 = vmax.f32 %v1499, 0.0
        %v1524 = vmax.f32 %v1502, 0.0
        %v1525 = vmax.f32 %v1507, 0.0
        %v1526 = vmax.f32 %v1510, 0.0
        %v1527 = vmax.f32 %v1515, 0.0
        %v1528 = vmax.f32 %v1518, 0.0
        %v1529 = vpack.c.bf16 %v1522, %v1521
        %v1530 = vpack.c.bf16 %v1524, %v1523
        %v1531 = vpack.c.bf16 %v1526, %v1525
        %v1532 = vpack.c.bf16 %v1528, %v1527
        %v1533 = vld [vmem:[%s7] sm:$0xf]
        %v1534 = vld [vmem:[%s7 + $0x4] sm:$0xf]
        %v1535 = vld [vmem:[%s7 + $0x8] sm:$0xf]
        %v1536 = vld [vmem:[%s7 + $0xc] sm:$0xf]
        %v1537 = vld [vmem:[%s7 + $0x10] sm:$0xf]
        %v1538 = vld [vmem:[%s7 + $0x14] sm:$0xf]
        %v1539 = vld [vmem:[%s7 + $0x18] sm:$0xf]
        %v1540 = vld [vmem:[%s7 + $0x1c] sm:$0xf]
        %v1541 = vld [vmem:[%s7 + $0x20] sm:$0xf]
        %v1542 = vld [vmem:[%s7 + $0x24] sm:$0xf]
        %v1543 = vld [vmem:[%s7 + $0x28] sm:$0xf]
        %v1544 = vld [vmem:[%s7 + $0x2c] sm:$0xf]
        %v1545 = vld [vmem:[%s7 + $0x30] sm:$0xf]
        %v1546 = vld [vmem:[%s7 + $0x34] sm:$0xf]
        %v1547 = vld [vmem:[%s7 + $0x38] sm:$0xf]
        %v1548 = vld [vmem:[%s7 + $0x3c] sm:$0xf]
        %v1549 = vld [vmem:[%s8] sm:$0x1]
        %v1551 = vlaneseq
        %v1552 = vshrl.u32 %v1551, 7
        %v1553 = vsub.s32 0, %v1552
        %v1554 = vrot.slane %v1549, %v1553
        %v1572 = vunpack.c.l.b16 %v1533
        %v1573 = vunpack.c.l.b16 %v1534
        %v1574 = vunpack.c.l.b16 %v1535
        %v1575 = vunpack.c.l.b16 %v1536
        %v1576 = vunpack.c.l.b16 %v1537
        %v1577 = vunpack.c.l.b16 %v1538
        %v1578 = vunpack.c.l.b16 %v1539
        %v1579 = vunpack.c.l.b16 %v1540
        %v1580 = vunpack.c.l.b16 %v1541
        %v1581 = vunpack.c.l.b16 %v1542
        %v1582 = vunpack.c.l.b16 %v1543
        %v1583 = vunpack.c.l.b16 %v1544
        %v1584 = vunpack.c.l.b16 %v1545
        %v1585 = vunpack.c.l.b16 %v1546
        %v1586 = vunpack.c.l.b16 %v1547
        %v1587 = vunpack.c.l.b16 %v1548
        %v1588 = vpack.c.b16 %v1573, %v1572
        %v1589 = vpack.c.b16 %v1575, %v1574
        %v1590 = vpack.c.b16 %v1577, %v1576
        %v1591 = vpack.c.b16 %v1579, %v1578
        %v1592 = vpack.c.b16 %v1581, %v1580
        %v1593 = vpack.c.b16 %v1583, %v1582
        %v1594 = vpack.c.b16 %v1585, %v1584
        %v1595 = vpack.c.b16 %v1587, %v1586
        %1604 = vmatprep.subr.bf16.mxu0 0
        %1605 = vmatpush1.bf16.msra.mxu0 %v1588
        %1606 = vmatprep.subr.bf16.mxu0 0
        %1607 = vmatpush1.bf16.msra.mxu0 %v1589
        %1608 = vmatprep.subr.bf16.mxu0 0
        %1609 = vmatpush1.bf16.msra.mxu0 %v1590
        %1610 = vmatprep.subr.bf16.mxu0 0
        %1611 = vmatpush1.bf16.msra.mxu0 %v1591
        %1612 = vmatprep.subr.bf16.mxu0 0
        %1613 = vmatpush1.bf16.msra.mxu0 %v1592
        %1614 = vmatprep.subr.bf16.mxu0 0
        %1615 = vmatpush1.bf16.msra.mxu0 %v1593
        %1616 = vmatprep.subr.bf16.mxu0 0
        %1617 = vmatpush1.bf16.msra.mxu0 %v1594
        %1618 = vmatprep.subr.bf16.mxu0 0
        %1619 = vmatpush1.bf16.msra.mxu0 %v1595
        %1620 = vmatprep.subr.bf16.mxu0 0
        %1621 = vmatpush1.bf16.msra.mxu0 0
        %1622 = vmatprep.subr.bf16.mxu0 0
        %1623 = vmatpush1.bf16.msra.mxu0 0
        %1624 = vmatprep.subr.bf16.mxu0 0
        %1625 = vmatpush1.bf16.msra.mxu0 0
        %1626 = vmatprep.subr.bf16.mxu0 0
        %1627 = vmatpush1.bf16.msra.mxu0 0
        %1628 = vmatprep.subr.bf16.mxu0 0
        %1629 = vmatpush1.bf16.msra.mxu0 0
        %1630 = vmatprep.subr.bf16.mxu0 0
        %1631 = vmatpush1.bf16.msra.mxu0 0
        %1632 = vmatprep.subr.bf16.mxu0 0
        %1633 = vmatpush1.bf16.msra.mxu0 0
        %1634 = vmatprep.subr.bf16.mxu0 0
        %1635 = vmatpush1.bf16.msra.mxu0 0
        %1636 = vmatprep.mubr.bf16.mxu0 0
        %1637 = vmatmul.mubr.bf16.gmra.mrb[0].mxu0 %v1529
        %v1638 = vpop.f32.mrb[0].mxu0
        %v1639 = vadd.f32 %v1554, %v1638
        %v1640 = vpop.f32.mrb[0].mxu0
        %v1641 = vpop.f32.mrb[0].mxu0
        %v1642 = vadd.f32 %v1554, %v1641
        %v1643 = vpop.f32.mrb[0].mxu0
        %1644 = vmatprep.mubr.bf16.mxu0 0
        %1645 = vmatmul.mubr.bf16.gmra.mrb[0].mxu0 %v1530
        %v1646 = vpop.f32.mrb[0].mxu0
        %v1647 = vadd.f32 %v1554, %v1646
        %v1648 = vpop.f32.mrb[0].mxu0
        %v1649 = vpop.f32.mrb[0].mxu0
        %v1650 = vadd.f32 %v1554, %v1649
        %v1651 = vpop.f32.mrb[0].mxu0
        %1652 = vmatprep.mubr.bf16.mxu0 0
        %1653 = vmatmul.mubr.bf16.gmra.mrb[0].mxu0 %v1531
        %v1654 = vpop.f32.mrb[0].mxu0
        %v1655 = vadd.f32 %v1554, %v1654
        %v1656 = vpop.f32.mrb[0].mxu0
        %v1657 = vpop.f32.mrb[0].mxu0
        %v1658 = vadd.f32 %v1554, %v1657
        %v1659 = vpop.f32.mrb[0].mxu0
        %1660 = vmatprep.mubr.bf16.mxu0 0
        %1661 = vmatmul.mubr.bf16.gmra.mrb[0].mxu0 %v1532
        %v1662 = vpop.f32.mrb[0].mxu0
        %v1663 = vadd.f32 %v1554, %v1662
        %v1664 = vpop.f32.mrb[0].mxu0
        %v1665 = vpop.f32.mrb[0].mxu0
        %v1666 = vadd.f32 %v1554, %v1665
        %v1667 = vpop.f32.mrb[0].mxu0
        %1668 = vdwg.mxu0
        %v1669 = vmax.f32 %v1639, 0.0
        %v1670 = vmax.f32 %v1642, 0.0
        %v1671 = vmax.f32 %v1647, 0.0
        %v1672 = vmax.f32 %v1650, 0.0
        %v1673 = vmax.f32 %v1655, 0.0
        %v1674 = vmax.f32 %v1658, 0.0
        %v1675 = vmax.f32 %v1663, 0.0
        %v1676 = vmax.f32 %v1666, 0.0
        %v1677 = vpack.c.bf16 %v1670, %v1669
        %v1678 = vpack.c.bf16 %v1672, %v1671
        %v1679 = vpack.c.bf16 %v1674, %v1673
        %v1680 = vpack.c.bf16 %v1676, %v1675
        %v1681 = vld [vmem:[#allocation5] sm:$0xf]
        %v1682 = vld [vmem:[#allocation5 + $0x4] sm:$0xf]
        %v1683 = vld [vmem:[#allocation5 + $0x8] sm:$0xf]
        %v1684 = vld [vmem:[#allocation5 + $0xc] sm:$0xf]
        %v1685 = vld [vmem:[#allocation5 + $0x10] sm:$0xf]
        %v1686 = vld [vmem:[#allocation5 + $0x14] sm:$0xf]
        %v1687 = vld [vmem:[#allocation5 + $0x18] sm:$0xf]
        %v1688 = vld [vmem:[#allocation5 + $0x1c] sm:$0xf]
        %v1689 = vld [vmem:[#allocation5 + $0x20] sm:$0xf]
        %v1690 = vld [vmem:[#allocation5 + $0x24] sm:$0xf]
        %v1691 = vld [vmem:[#allocation5 + $0x28] sm:$0xf]
        %v1692 = vld [vmem:[#allocation5 + $0x2c] sm:$0xf]
        %v1693 = vld [vmem:[#allocation5 + $0x30] sm:$0xf]
        %v1694 = vld [vmem:[#allocation5 + $0x34] sm:$0xf]
        %v1695 = vld [vmem:[#allocation5 + $0x38] sm:$0xf]
        %v1696 = vld [vmem:[#allocation5 + $0x3c] sm:$0xf]
        %v1697 = vld [vmem:[%s10] sm:$0x1]
        %v1699 = vlaneseq
        %v1700 = vshrl.u32 %v1699, 7
        %v1701 = vsub.s32 0, %v1700
        %v1702 = vrot.slane %v1697, %v1701
        %v1720 = vunpack.c.l.b16 %v1681
        %v1721 = vunpack.c.l.b16 %v1682
        %v1722 = vunpack.c.l.b16 %v1683
        %v1723 = vunpack.c.l.b16 %v1684
        %v1724 = vunpack.c.l.b16 %v1685
        %v1725 = vunpack.c.l.b16 %v1686
        %v1726 = vunpack.c.l.b16 %v1687
        %v1727 = vunpack.c.l.b16 %v1688
        %v1728 = vunpack.c.l.b16 %v1689
        %v1729 = vunpack.c.l.b16 %v1690
        %v1730 = vunpack.c.l.b16 %v1691
        %v1731 = vunpack.c.l.b16 %v1692
        %v1732 = vunpack.c.l.b16 %v1693
        %v1733 = vunpack.c.l.b16 %v1694
        %v1734 = vunpack.c.l.b16 %v1695
        %v1735 = vunpack.c.l.b16 %v1696
        %v1736 = vpack.c.b16 %v1721, %v1720
        %v1737 = vpack.c.b16 %v1723, %v1722
        %v1738 = vpack.c.b16 %v1725, %v1724
        %v1739 = vpack.c.b16 %v1727, %v1726
        %v1740 = vpack.c.b16 %v1729, %v1728
        %v1741 = vpack.c.b16 %v1731, %v1730
        %v1742 = vpack.c.b16 %v1733, %v1732
        %v1743 = vpack.c.b16 %v1735, %v1734
        %1752 = vmatprep.subr.bf16.mxu0 0
        %1753 = vmatpush1.bf16.msra.mxu0 %v1736
        %1754 = vmatprep.subr.bf16.mxu0 0
        %1755 = vmatpush1.bf16.msra.mxu0 %v1737
        %1756 = vmatprep.subr.bf16.mxu0 0
        %1757 = vmatpush1.bf16.msra.mxu0 %v1738
        %1758 = vmatprep.subr.bf16.mxu0 0
        %1759 = vmatpush1.bf16.msra.mxu0 %v1739
        %1760 = vmatprep.subr.bf16.mxu0 0
        %1761 = vmatpush1.bf16.msra.mxu0 %v1740
        %1762 = vmatprep.subr.bf16.mxu0 0
        %1763 = vmatpush1.bf16.msra.mxu0 %v1741
        %1764 = vmatprep.subr.bf16.mxu0 0
        %1765 = vmatpush1.bf16.msra.mxu0 %v1742
        %1766 = vmatprep.subr.bf16.mxu0 0
        %1767 = vmatpush1.bf16.msra.mxu0 %v1743
        %1768 = vmatprep.subr.bf16.mxu0 0
        %1769 = vmatpush1.bf16.msra.mxu0 0
        %1770 = vmatprep.subr.bf16.mxu0 0
        %1771 = vmatpush1.bf16.msra.mxu0 0
        %1772 = vmatprep.subr.bf16.mxu0 0
        %1773 = vmatpush1.bf16.msra.mxu0 0
        %1774 = vmatprep.subr.bf16.mxu0 0
        %1775 = vmatpush1.bf16.msra.mxu0 0
        %1776 = vmatprep.subr.bf16.mxu0 0
        %1777 = vmatpush1.bf16.msra.mxu0 0
        %1778 = vmatprep.subr.bf16.mxu0 0
        %1779 = vmatpush1.bf16.msra.mxu0 0
        %1780 = vmatprep.subr.bf16.mxu0 0
        %1781 = vmatpush1.bf16.msra.mxu0 0
        %1782 = vmatprep.subr.bf16.mxu0 0
        %1783 = vmatpush1.bf16.msra.mxu0 0
        %1784 = vmatprep.mubr.bf16.mxu0 0
        %1785 = vmatmul.mubr.bf16.gmra.mrb[0].mxu0 %v1677
        %v1786 = vpop.f32.mrb[0].mxu0
        %v1787 = vadd.f32 %v1702, %v1786
        %v1788 = vpop.f32.mrb[0].mxu0
        %v1789 = vpop.f32.mrb[0].mxu0
        %v1790 = vadd.f32 %v1702, %v1789
        %v1791 = vpop.f32.mrb[0].mxu0
        %1792 = vmatprep.mubr.bf16.mxu0 0
        %1793 = vmatmul.mubr.bf16.gmra.mrb[0].mxu0 %v1678
        %v1794 = vpop.f32.mrb[0].mxu0
        %v1795 = vadd.f32 %v1702, %v1794
        %v1796 = vpop.f32.mrb[0].mxu0
        %v1797 = vpop.f32.mrb[0].mxu0
        %v1798 = vadd.f32 %v1702, %v1797
        %v1799 = vpop.f32.mrb[0].mxu0
        %1800 = vmatprep.mubr.bf16.mxu0 0
        %1801 = vmatmul.mubr.bf16.gmra.mrb[0].mxu0 %v1679
        %v1802 = vpop.f32.mrb[0].mxu0
        %v1803 = vadd.f32 %v1702, %v1802
        %v1804 = vpop.f32.mrb[0].mxu0
        %v1805 = vpop.f32.mrb[0].mxu0
        %v1806 = vadd.f32 %v1702, %v1805
        %v1807 = vpop.f32.mrb[0].mxu0
        %1808 = vmatprep.mubr.bf16.mxu0 0
        %1809 = vmatmul.mubr.bf16.gmra.mrb[0].mxu0 %v1680
        %v1810 = vpop.f32.mrb[0].mxu0
        %v1811 = vadd.f32 %v1702, %v1810
        %v1812 = vpop.f32.mrb[0].mxu0
        %v1813 = vpop.f32.mrb[0].mxu0
        %v1814 = vadd.f32 %v1702, %v1813
        %v1815 = vpop.f32.mrb[0].mxu0
        %1816 = vdwg.mxu0
        %v1817 = vmax.f32 %v1787, 0.0
        %v1818 = vmax.f32 %v1790, 0.0
        %v1819 = vmax.f32 %v1795, 0.0
        %v1820 = vmax.f32 %v1798, 0.0
        %v1821 = vmax.f32 %v1803, 0.0
        %v1822 = vmax.f32 %v1806, 0.0
        %v1823 = vmax.f32 %v1811, 0.0
        %v1824 = vmax.f32 %v1814, 0.0
        %v1825 = vpack.c.bf16 %v1818, %v1817
        %v1826 = vpack.c.bf16 %v1820, %v1819
        %v1827 = vpack.c.bf16 %v1822, %v1821
        %v1828 = vpack.c.bf16 %v1824, %v1823
        %v1829 = vld [vmem:[%s11] sm:$0xf]
        %v1830 = vld [vmem:[%s11 + $0x4] sm:$0xf]
        %v1831 = vld [vmem:[%s11 + $0x8] sm:$0xf]
        %v1832 = vld [vmem:[%s11 + $0xc] sm:$0xf]
        %v1833 = vld [vmem:[%s11 + $0x10] sm:$0xf]
        %v1834 = vld [vmem:[%s11 + $0x14] sm:$0xf]
        %v1835 = vld [vmem:[%s11 + $0x18] sm:$0xf]
        %v1836 = vld [vmem:[%s11 + $0x1c] sm:$0xf]
        %v1837 = vld [vmem:[%s11 + $0x20] sm:$0xf]
        %v1838 = vld [vmem:[%s11 + $0x24] sm:$0xf]
        %v1839 = vld [vmem:[%s11 + $0x28] sm:$0xf]
        %v1840 = vld [vmem:[%s11 + $0x2c] sm:$0xf]
        %v1841 = vld [vmem:[%s11 + $0x30] sm:$0xf]
        %v1842 = vld [vmem:[%s11 + $0x34] sm:$0xf]
        %v1843 = vld [vmem:[%s11 + $0x38] sm:$0xf]
        %v1844 = vld [vmem:[%s11 + $0x3c] sm:$0xf]
        %v1845 = vld [vmem:[#allocation2] sm:$0x1]
        %v1847 = vlaneseq
        %v1848 = vshrl.u32 %v1847, 7
        %v1849 = vsub.s32 0, %v1848
        %v1850 = vrot.slane %v1845, %v1849
        %v1868 = vunpack.c.l.b16 %v1829
        %v1869 = vunpack.c.l.b16 %v1830
        %v1870 = vunpack.c.l.b16 %v1831
        %v1871 = vunpack.c.l.b16 %v1832
        %v1872 = vunpack.c.l.b16 %v1833
        %v1873 = vunpack.c.l.b16 %v1834
        %v1874 = vunpack.c.l.b16 %v1835
        %v1875 = vunpack.c.l.b16 %v1836
        %v1876 = vunpack.c.l.b16 %v1837
        %v1877 = vunpack.c.l.b16 %v1838
        %v1878 = vunpack.c.l.b16 %v1839
        %v1879 = vunpack.c.l.b16 %v1840
        %v1880 = vunpack.c.l.b16 %v1841
        %v1881 = vunpack.c.l.b16 %v1842
        %v1882 = vunpack.c.l.b16 %v1843
        %v1883 = vunpack.c.l.b16 %v1844
        %v1884 = vpack.c.b16 %v1869, %v1868
        %v1885 = vpack.c.b16 %v1871, %v1870
        %v1886 = vpack.c.b16 %v1873, %v1872
        %v1887 = vpack.c.b16 %v1875, %v1874
        %v1888 = vpack.c.b16 %v1877, %v1876
        %v1889 = vpack.c.b16 %v1879, %v1878
        %v1890 = vpack.c.b16 %v1881, %v1880
        %v1891 = vpack.c.b16 %v1883, %v1882
        %1900 = vmatprep.subr.bf16.mxu0 0
        %1901 = vmatpush1.bf16.msra.mxu0 %v1884
        %1902 = vmatprep.subr.bf16.mxu0 0
        %1903 = vmatpush1.bf16.msra.mxu0 %v1885
        %1904 = vmatprep.subr.bf16.mxu0 0
        %1905 = vmatpush1.bf16.msra.mxu0 %v1886
        %1906 = vmatprep.subr.bf16.mxu0 0
        %1907 = vmatpush1.bf16.msra.mxu0 %v1887
        %1908 = vmatprep.subr.bf16.mxu0 0
        %1909 = vmatpush1.bf16.msra.mxu0 %v1888
        %1910 = vmatprep.subr.bf16.mxu0 0
        %1911 = vmatpush1.bf16.msra.mxu0 %v1889
        %1912 = vmatprep.subr.bf16.mxu0 0
        %1913 = vmatpush1.bf16.msra.mxu0 %v1890
        %1914 = vmatprep.subr.bf16.mxu0 0
        %1915 = vmatpush1.bf16.msra.mxu0 %v1891
        %1916 = vmatprep.subr.bf16.mxu0 0
        %1917 = vmatpush1.bf16.msra.mxu0 0
        %1918 = vmatprep.subr.bf16.mxu0 0
        %1919 = vmatpush1.bf16.msra.mxu0 0
        %1920 = vmatprep.subr.bf16.mxu0 0
        %1921 = vmatpush1.bf16.msra.mxu0 0
        %1922 = vmatprep.subr.bf16.mxu0 0
        %1923 = vmatpush1.bf16.msra.mxu0 0
        %1924 = vmatprep.subr.bf16.mxu0 0
        %1925 = vmatpush1.bf16.msra.mxu0 0
        %1926 = vmatprep.subr.bf16.mxu0 0
        %1927 = vmatpush1.bf16.msra.mxu0 0
        %1928 = vmatprep.subr.bf16.mxu0 0
        %1929 = vmatpush1.bf16.msra.mxu0 0
        %1930 = vmatprep.subr.bf16.mxu0 0
        %1931 = vmatpush1.bf16.msra.mxu0 0
        %1932 = vmatprep.mubr.bf16.mxu0 0
        %1933 = vmatmul.mubr.bf16.gmra.mrb[0].mxu0 %v1825
        %v1934 = vpop.f32.mrb[0].mxu0
        %v1935 = vadd.f32 %v1850, %v1934
        %v1936 = vpop.f32.mrb[0].mxu0
        %v1937 = vpop.f32.mrb[0].mxu0
        %v1938 = vadd.f32 %v1850, %v1937
        %v1939 = vpop.f32.mrb[0].mxu0
        %1940 = vmatprep.mubr.bf16.mxu0 0
        %1941 = vmatmul.mubr.bf16.gmra.mrb[0].mxu0 %v1826
        %v1942 = vpop.f32.mrb[0].mxu0
        %v1943 = vadd.f32 %v1850, %v1942
        %v1944 = vpop.f32.mrb[0].mxu0
        %v1945 = vpop.f32.mrb[0].mxu0
        %v1946 = vadd.f32 %v1850, %v1945
        %v1947 = vpop.f32.mrb[0].mxu0
        %1948 = vmatprep.mubr.bf16.mxu0 0
        %1949 = vmatmul.mubr.bf16.gmra.mrb[0].mxu0 %v1827
        %v1950 = vpop.f32.mrb[0].mxu0
        %v1951 = vadd.f32 %v1850, %v1950
        %v1952 = vpop.f32.mrb[0].mxu0
        %v1953 = vpop.f32.mrb[0].mxu0
        %v1954 = vadd.f32 %v1850, %v1953
        %v1955 = vpop.f32.mrb[0].mxu0
        %1956 = vmatprep.mubr.bf16.mxu0 0
        %1957 = vmatmul.mubr.bf16.gmra.mrb[0].mxu0 %v1828
        %v1958 = vpop.f32.mrb[0].mxu0
        %v1959 = vadd.f32 %v1850, %v1958
        %v1960 = vpop.f32.mrb[0].mxu0
        %v1961 = vpop.f32.mrb[0].mxu0
        %v1962 = vadd.f32 %v1850, %v1961
        %v1963 = vpop.f32.mrb[0].mxu0
        %1964 = vdwg.mxu0
        %v1965 = vxor.u32 %v1935, 2147483648
        %v1966 = vxor.u32 %v1938, 2147483648
        %v1967 = vxor.u32 %v1943, 2147483648
        %v1968 = vxor.u32 %v1946, 2147483648
        %v1969 = vxor.u32 %v1951, 2147483648
        %v1970 = vxor.u32 %v1954, 2147483648
        %v1971 = vxor.u32 %v1959, 2147483648
        %v1972 = vxor.u32 %v1962, 2147483648
        %v1973 = vmul.f32 %v1965, 1.442695
        %v1974 = vpow.pop %v1973
        %v1975 = vmul.f32 %v1966, 1.442695
        %v1976 = vpow.pop %v1975
        %v1977 = vmul.f32 %v1967, 1.442695
        %v1978 = vpow.pop %v1977
        %v1979 = vmul.f32 %v1968, 1.442695
        %v1980 = vpow.pop %v1979
        %v1981 = vmul.f32 %v1969, 1.442695
        %v1982 = vpow.pop %v1981
        %v1983 = vmul.f32 %v1970, 1.442695
        %v1984 = vpow.pop %v1983
        %v1985 = vmul.f32 %v1971, 1.442695
        %v1986 = vpow.pop %v1985
        %v1987 = vmul.f32 %v1972, 1.442695
        %v1988 = vpow.pop %v1987
        %v1989 = vadd.f32 %v1974, 1.0
        %v1990 = vadd.f32 %v1976, 1.0
        %v1991 = vadd.f32 %v1978, 1.0
        %v1992 = vadd.f32 %v1980, 1.0
        %v1993 = vadd.f32 %v1982, 1.0
        %v1994 = vadd.f32 %v1984, 1.0
        %v1995 = vadd.f32 %v1986, 1.0
        %v1996 = vadd.f32 %v1988, 1.0
        %v1997 = vrcp.pop %v1989
        %v1998 = vmul.f32 1.0, %v1997
        %v1999 = vrcp.pop %v1990
        %v2000 = vmul.f32 1.0, %v1999
        %v2001 = vrcp.pop %v1991
        %v2002 = vmul.f32 1.0, %v2001
        %v2003 = vrcp.pop %v1992
        %v2004 = vmul.f32 1.0, %v2003
        %v2005 = vrcp.pop %v1993
        %v2006 = vmul.f32 1.0, %v2005
        %v2007 = vrcp.pop %v1994
        %v2008 = vmul.f32 1.0, %v2007
        %v2009 = vrcp.pop %v1995
        %v2010 = vmul.f32 1.0, %v2009
        %v2011 = vrcp.pop %v1996
        %v2012 = vmul.f32 1.0, %v2011
        %vm2013 = vcmask 7168
        %2014 = vst.msk [vmem:[%s472] sm:$0xff] %vm2013, %v1998
        %2015 = vst.msk [vmem:[%s472 + $0x8] sm:$0xff] %vm2013, %v2000
        %2016 = vst.msk [vmem:[%s472 + $0x10] sm:$0xff] %vm2013, %v2002
        %2017 = vst.msk [vmem:[%s472 + $0x18] sm:$0xff] %vm2013, %v2004
        %2018 = vst.msk [vmem:[%s472 + $0x20] sm:$0xff] %vm2013, %v2006
        %2019 = vst.msk [vmem:[%s472 + $0x28] sm:$0xff] %vm2013, %v2008
        %2020 = vst.msk [vmem:[%s472 + $0x30] sm:$0xff] %vm2013, %v2010
        %2021 = vst.msk [vmem:[%s472 + $0x38] sm:$0xff] %vm2013, %v2012
        %s2022 = smul.u32 8, %s28
        %p2023 = scmp.lt.s32.totalorder %s2022, 23
        %s2024 = scalar_select %p2023, %s2022, 23
        %s2025 = smul.addr %s2024, 8
        %s2026 = scalar_lea.vmem %s13, %s2025
        // Predicated region
        $region81: #{tpu_custom_call.1} parent=71 // pred_check
          %p2027 = pneg %p324
        $region82: #{tpu_custom_call.1} parent=71 // pred_check_branch
          %2029 = sbr.rel (%p2027) target = $region84
        $region83: #{tpu_custom_call.1} parent=71 // pred_region
          %s2030 = smul.u32 8, %s28
        $region84: #{tpu_custom_call.1} parent=71 // pred_fallthru
          _
      $region72: #{tpu_custom_call.1} parent=5 // pred_fallthru
        _
      %p2031 = scmp.le.s32.totalorder 2, %s23
      // Predicated region
      $region85: #{tpu_custom_call.1} parent=5 // pred_check
        %p2032 = pneg %p2031
      $region86: #{tpu_custom_call.1} parent=5 // pred_check_branch
        %2034 = sbr.rel (%p2032) target = $region88
      $region87: #{tpu_custom_call.1} parent=5 // pred_region
        %s2035 = ssub.s32 %s23, 2
        // Predicated region
        $region89: #{tpu_custom_call.1} parent=87 // pred_check
          %p2036 = pneg %p330
        $region90: #{tpu_custom_call.1} parent=87 // pred_check_branch
          %2038 = sbr.rel (%p2036) target = $region92
        $region91: #{tpu_custom_call.1} parent=87 // pred_region
          %s2039 = smul.u32 8, %s29
          %p2040 = scmp.lt.s32.totalorder %s2039, 23
          %s2041 = scalar_select %p2040, %s2039, 23
          %s2042 = smul.addr %s2041, 8
          %s2043 = scalar_lea.vmem %s13, %s2042
        $region92: #{tpu_custom_call.1} parent=87 // pred_fallthru
          _
      $region88: #{tpu_custom_call.1} parent=5 // pred_fallthru
        _
    $region6: #{tpu_custom_call.1} parent=1 // loop_footer
      %s27 = sadd.s32 1, %s23
    $region7: #{tpu_custom_call.1} parent=1 // loop_footer_branch
      %22 = sbr.rel target = $region3
    $region8: #{tpu_custom_call.1} parent=1 // loop_exit
      _
    %2044 = vsyncpa [#allocation4], 1
    %s2045 = scalar_lea.sflag [#allocation4], 1
    %2046 = vsyncpa %s2045, 1
    %2047 = vsyncpa [#allocation6], 1

</llo_original>
